<compile_context>
chip_gen: v5e
topology: v5e:2x2
jax: 0.10.0
libtpu: 0.0.40
codegen_flags: <defaults>
</compile_context>

<pallas_src>
import functools

import jax
import jax.numpy as jnp
from jax import lax
from jax.experimental import pallas as pl
from jax.experimental.pallas import tpu as pltpu

LANE = 128  # MLP head padded output width (one full lane group)


def big_lstm_kernel(x_ref,                          # (T*B, D)   bf16, time-major flattened
                    wih0_ref, whh0_ref, b0_ref,     # (D,4H) bf16, (H,4H) bf16, (1,4H) f32
                    wih1_ref, whh1_ref, b1_ref,     # (H,4H) bf16, (H,4H) bf16, (1,4H) f32
                    mw0_ref, mb0_ref,               # MLP head, weights bf16 (in,128), biases f32 (1,128)
                    mw1_ref, mb1_ref,
                    mw2_ref, mb2_ref,
                    mw3_ref, mb3_ref,
                    o_ref,                          # (B, 128) f32, real result in column 0
                    xw0_scr,                        # (T*B, 4H) f32 scratch
                    *, seq_len):
    TB, _ = x_ref.shape
    B = TB // seq_len
    H = whh0_ref.shape[0]
    G = 4 * H

    # ---- hoisted layer-0 input projection (one well-shaped matmul off the serial
    # critical path), bias folded in once ------------------------------------------
    # TODO(synk): for long sequences on v7x (64 MiB VMEM/TC), make this scratch bf16
    # and/or stream x over T-chunks with a grid axis instead of one resident buffer.
    xw0_scr[...] = (jnp.dot(x_ref[...], wih0_ref[...],
                            preferred_element_type=jnp.float32)
                    + b0_ref[...])

    whh0 = whh0_ref[...]
    wih1 = wih1_ref[...]
    whh1 = whh1_ref[...]
    # hoist the layer-1 bias broadcast out of the loop (JAX does not CSE broadcasts)
    b1_full = jnp.broadcast_to(b1_ref[...], (B, G))

    # The g-gate (cell candidate) columns of all LSTM weights/biases were pre-scaled
    # by 2 at pack time, so ONE sigmoid pass over the (B, 4H) gate tile yields
    # sigmoid for i/f/o lanes and (tanh(g)+1)/2 for g lanes; this hoisted per-lane
    # multiply-add recovers tanh(g) = 2*sigmoid(2g) - 1 on the VPU.
    lane = lax.broadcasted_iota(jnp.int32, (B, G), 1)
    is_g = (lane >= 2 * H) & (lane < 3 * H)
    post_mul = jnp.where(is_g, 2.0, 1.0).astype(jnp.float32)
    post_add = jnp.where(is_g, -1.0, 0.0).astype(jnp.float32)

    def gates_to_hc(gates, c):
        act = jax.nn.sigmoid(gates) * post_mul + post_add   # single EUP pass
        i = act[:, 0:H]
        f = act[:, H:2 * H]
        g = act[:, 2 * H:3 * H]
        o = act[:, 3 * H:4 * H]
        c_new = f * c + i * g
        h_new = o * jnp.tanh(c_new)
        return h_new, c_new

    # TODO(synk): on v6e/v7x, whh0/wih1/whh1 could be kept stationary in MXU weight
    # staging (pltpu.matmul_push_rhs / matmul_acc_lhs / matmul_pop) across the time
    # loop; verify with a bundle dump before committing.
    def step(t, carry):
        h0, c0, h1, c1 = carry
        start = pl.multiple_of(t * B, B)
        # layer-1 recurrent matmul depends only on LAST step's h1: schedulable in
        # parallel with layer-0's work for this step under the unrolled loop.
        r1 = jnp.dot(h1.astype(jnp.bfloat16), whh1,
                     preferred_element_type=jnp.float32)
        # layer 0: only the recurrent matmul remains in the serial chain
        g0 = xw0_scr[pl.ds(start, B), :] + jnp.dot(
            h0.astype(jnp.bfloat16), whh0, preferred_element_type=jnp.float32)
        h0, c0 = gates_to_hc(g0, c0)
        # layer 1: un-fused input + recurrent matmuls
        g1 = jnp.dot(h0.astype(jnp.bfloat16), wih1,
                     preferred_element_type=jnp.float32) + r1 + b1_full
        h1, c1 = gates_to_hc(g1, c1)
        return (h0, c0, h1, c1)

    zeros = jnp.zeros((B, H), jnp.float32)            # h0 = c0 = 0, as in the module
    unroll = True if seq_len <= 16 else 8             # bound code size at large T
    _, _, h1, _ = lax.fori_loop(0, seq_len, step, (zeros, zeros, zeros, zeros),
                                unroll=unroll)

    # ---- MLP head on out[:, -1, :] (Dropout is identity at inference) -------------
    def mish(v):
        # stable softplus (no inf intermediates), matches PyTorch Mish
        sp = jnp.maximum(v, 0.0) + jnp.log(1.0 + jnp.exp(-jnp.abs(v)))
        return v * jnp.tanh(sp)

    def lin(z, w_ref, b_ref):
        return jnp.dot(z.astype(jnp.bfloat16), w_ref[...],
                       preferred_element_type=jnp.float32) + b_ref[...]

    z = h1
    z = mish(lin(z, mw0_ref, mb0_ref))
    z = mish(lin(z, mw1_ref, mb1_ref))
    z = mish(lin(z, mw2_ref, mb2_ref))
    z = lin(z, mw3_ref, mb3_ref)                      # (B, 128); column 0 is the result
    o_ref[...] = z.astype(o_ref.dtype)                # full-lane, unmasked store


def pack_params(params):
    """Logical f32 params -> kernel layout (bf16 weights, g-gate x2 pre-scale, padded MLP)."""
    (wih0, whh0, b0, wih1, whh1, b1,
     mw0, mb0, mw1, mb1, mw2, mb2, mw3, mb3) = params
    bf = jnp.bfloat16
    H = whh0.shape[0]

    def scale_g(w):
        # scale g-gate columns by 2 (exact in bf16/f32) so the kernel needs only one
        # sigmoid pass per gate block: tanh(g) = 2*sigmoid(2g) - 1.
        return w.at[..., 2 * H:3 * H].multiply(2.0)

    def pad_to(w, rows, cols):
        return jnp.pad(w, ((0, rows - w.shape[0]), (0, cols - w.shape[1])))

    m0 = pad_to(mw0, mw0.shape[0], LANE)                          # (H, 128)
    m1 = pad_to(mw1, LANE, LANE)
    m2 = pad_to(mw2, LANE, LANE)
    m3 = pad_to(mw3, LANE, LANE)
    pb = lambda b: pad_to(b, 1, LANE)
    return (scale_g(wih0).astype(bf), scale_g(whh0).astype(bf), scale_g(b0),
            scale_g(wih1).astype(bf), scale_g(whh1).astype(bf), scale_g(b1),
            m0.astype(bf), pb(mb0), m1.astype(bf), pb(mb1),
            m2.astype(bf), pb(mb2), m3.astype(bf), pb(mb3))


def big_lstm_forward(x, params):
    """x: (B, T, D) batch-first f32; params: 14 logical (in,out)-layout f32 arrays."""
    B, T, D = x.shape
    H = params[1].shape[0]                                        # whh0 is (H, 4H)
    # bf16 MXU LHS rows pack 2 per sublane -> pad batch to a multiple of 16.  Extra
    # rows compute on zero inputs and are discarded below.  Callers should pack many
    # independent sequences into B (rows are ~free up to the MXU height).
    B_pad = max(16, ((B + 15) // 16) * 16)

    # time-major, batch-padded, flattened to (T*B_pad, D) so the kernel is all-2D
    xt = jnp.transpose(x, (1, 0, 2))
    xt = jnp.pad(xt, ((0, 0), (0, B_pad - B), (0, 0)))
    x_flat = xt.reshape(T * B_pad, D).astype(jnp.bfloat16)

    packed = pack_params(params)
    vmem = pl.BlockSpec(memory_space=pltpu.MemorySpace.VMEM)
    kernel = functools.partial(big_lstm_kernel, seq_len=T)

    # TODO(synk): for large batches on v7x, add a batch grid axis with
    # dimension_semantics=("parallel",) to use the second TensorCore.
    out = pl.pallas_call(
        kernel,
        out_shape=jax.ShapeDtypeStruct((B_pad, LANE), jnp.float32),
        in_specs=[vmem] * (1 + len(packed)),
        out_specs=vmem,
        scratch_shapes=[pltpu.VMEM((T * B_pad, 4 * H), jnp.float32)],
        compiler_params=pltpu.CompilerParams(
            vmem_limit_bytes=32 * 1024 * 1024),   # v5e's default scoped limit is 16 MiB
    )(x_flat, *packed)
    return out[:B, :1]


def init_params(key, input_dim, hidden, mlp_units):
    """Deterministic synthetic init (uniform, PyTorch-like scale), (in,out) layout."""
    params = []
    ks = iter(jax.random.split(key, 64))
    k_lstm = 1.0 / jnp.sqrt(hidden)

    def u(shape, scale):
        return jax.random.uniform(next(ks), shape, jnp.float32, -scale, scale)

    # LSTM layer 0 (transposed): wih (D,4H), whh (H,4H), bias = b_ih + b_hh (1,4H)
    params += [u((input_dim, 4 * hidden), k_lstm),
               u((hidden, 4 * hidden), k_lstm),
               u((1, 4 * hidden), k_lstm) + u((1, 4 * hidden), k_lstm)]
    # LSTM layer 1 (input size == hidden)
    params += [u((hidden, 4 * hidden), k_lstm),
               u((hidden, 4 * hidden), k_lstm),
               u((1, 4 * hidden), k_lstm) + u((1, 4 * hidden), k_lstm)]
    # MLP: hidden -> mlp_units... -> 1
    prev = hidden
    for h in list(mlp_units) + [1]:
        k_lin = 1.0 / jnp.sqrt(prev)
        params += [u((prev, h), k_lin), u((1, h), k_lin)]
        prev = h
    return tuple(params)


def ref_forward(x, params):
    """Pure-JAX reference with the same bf16-operand / f32-accumulate math."""
    (wih0, whh0, b0, wih1, whh1, b1,
     mw0, mb0, mw1, mb1, mw2, mb2, mw3, mb3) = params
    bf = jnp.bfloat16
    B, T, _ = x.shape
    H = whh0.shape[0]

    def dot32(a, b):
        return jnp.dot(a.astype(bf), b.astype(bf), preferred_element_type=jnp.float32)

    def cell(x_t, h, c, wih, whh, b):
        g = dot32(x_t, wih) + dot32(h, whh) + b
        i = jax.nn.sigmoid(g[:, :H]); f = jax.nn.sigmoid(g[:, H:2 * H])
        gg = jnp.tanh(g[:, 2 * H:3 * H]); o = jax.nn.sigmoid(g[:, 3 * H:])
        c = f * c + i * gg
        return o * jnp.tanh(c), c

    h0 = c0 = h1 = c1 = jnp.zeros((B, H), jnp.float32)
    for t in range(T):
        h0, c0 = cell(x[:, t, :], h0, c0, wih0, whh0, b0)
        h1, c1 = cell(h0, h1, c1, wih1, whh1, b1)

    def mish(v):
        return v * jnp.tanh(jax.nn.softplus(v))

    z = h1
    z = mish(dot32(z, mw0) + mb0)
    z = mish(dot32(z, mw1) + mb1)
    z = mish(dot32(z, mw2) + mb2)
    return dot32(z, mw3) + mb3


if __name__ == "__main__":
    # Small shapes consistent with the module: batch=4, seq=8, input_dim=16,
    # lstm_hidden_dim=32, lstm_layers=2, mlp_hidden_units=[32, 16, 8].
    B, T, D, H = 4, 8, 16, 32
    mlp_units = [32, 16, 8]

    key = jax.random.PRNGKey(0)
    kx, kp = jax.random.split(key)
    x = jax.random.normal(kx, (B, T, D), jnp.float32)
    params = init_params(kp, D, H, mlp_units)

    out = jax.block_until_ready(big_lstm_forward(x, params))
    ref = jax.block_until_ready(ref_forward(x, params))

    assert out.shape == (B, 1), out.shape
    assert jnp.allclose(out, ref, atol=1e-3, rtol=1e-3), (out, ref)
    print("KERNEL_OK")
</pallas_src>

<mosaic_0001>
module attributes {stable_mosaic.version = 11 : i64} {
  func.func @big_lstm_kernel(%arg0: memref<128x16xbf16, #tpu.memory_space<vmem>>, %arg1: memref<16x128xbf16, #tpu.memory_space<vmem>>, %arg2: memref<32x128xbf16, #tpu.memory_space<vmem>>, %arg3: memref<1x128xf32, #tpu.memory_space<vmem>>, %arg4: memref<32x128xbf16, #tpu.memory_space<vmem>>, %arg5: memref<32x128xbf16, #tpu.memory_space<vmem>>, %arg6: memref<1x128xf32, #tpu.memory_space<vmem>>, %arg7: memref<32x128xbf16, #tpu.memory_space<vmem>>, %arg8: memref<1x128xf32, #tpu.memory_space<vmem>>, %arg9: memref<128x128xbf16, #tpu.memory_space<vmem>>, %arg10: memref<1x128xf32, #tpu.memory_space<vmem>>, %arg11: memref<128x128xbf16, #tpu.memory_space<vmem>>, %arg12: memref<1x128xf32, #tpu.memory_space<vmem>>, %arg13: memref<128x128xbf16, #tpu.memory_space<vmem>>, %arg14: memref<1x128xf32, #tpu.memory_space<vmem>>, %arg15: memref<16x128xf32, #tpu.memory_space<vmem>>, %arg16: memref<128x128xf32, #tpu.memory_space<vmem>>) attributes {dimension_semantics = [], scalar_prefetch = 0 : i64, scratch_operands = 1 : i64, tpu.core_type = #tpu.core_type<tc>} {
    %c0 = arith.constant 0 : index
    %c0_0 = arith.constant 0 : index
    %0 = vector.load %arg0[%c0, %c0_0] : memref<128x16xbf16, #tpu.memory_space<vmem>>, vector<128x16xbf16>
    %c0_1 = arith.constant 0 : index
    %c0_2 = arith.constant 0 : index
    %1 = vector.load %arg1[%c0_1, %c0_2] : memref<16x128xbf16, #tpu.memory_space<vmem>>, vector<16x128xbf16>
    %cst = arith.constant dense<0.000000e+00> : vector<128x128xf32>
    %2 = tpu.matmul %0, %1, %cst {dimension_numbers = #tpu.dot_dimension_numbers<[1], [0], [0], [1], [0, 0, 1, 1], [], []>} : vector<128x16xbf16>, vector<16x128xbf16>, vector<128x128xf32> -> vector<128x128xf32>
    %c0_3 = arith.constant 0 : index
    %c0_4 = arith.constant 0 : index
    %3 = vector.load %arg3[%c0_3, %c0_4] : memref<1x128xf32, #tpu.memory_space<vmem>>, vector<1x128xf32>
    %4 = vector.broadcast %3 : vector<1x128xf32> to vector<128x128xf32>
    %5 = arith.addf %2, %4 : vector<128x128xf32>
    %c0_5 = arith.constant 0 : index
    %c0_6 = arith.constant 0 : index
    %6 = vector.load %arg16[%c0_5, %c0_6] : memref<128x128xf32, #tpu.memory_space<vmem>>, vector<128x128xf32>
    tpu.vector_store %arg16[%c0_5, %c0_6], %5 {strides = array<i32>} : memref<128x128xf32, #tpu.memory_space<vmem>>, vector<128x128xf32>,
    %c0_7 = arith.constant 0 : index
    %c0_8 = arith.constant 0 : index
    %7 = vector.load %arg2[%c0_7, %c0_8] : memref<32x128xbf16, #tpu.memory_space<vmem>>, vector<32x128xbf16>
    %c0_9 = arith.constant 0 : index
    %c0_10 = arith.constant 0 : index
    %8 = vector.load %arg4[%c0_9, %c0_10] : memref<32x128xbf16, #tpu.memory_space<vmem>>, vector<32x128xbf16>
    %c0_11 = arith.constant 0 : index
    %c0_12 = arith.constant 0 : index
    %9 = vector.load %arg5[%c0_11, %c0_12] : memref<32x128xbf16, #tpu.memory_space<vmem>>, vector<32x128xbf16>
    %c0_13 = arith.constant 0 : index
    %c0_14 = arith.constant 0 : index
    %10 = vector.load %arg6[%c0_13, %c0_14] : memref<1x128xf32, #tpu.memory_space<vmem>>, vector<1x128xf32>
    %11 = vector.shape_cast %10 : vector<1x128xf32> to vector<1x128xf32>
    %12 = vector.broadcast %11 : vector<1x128xf32> to vector<16x128xf32>
    %13 = tpu.iota {dimensions = array<i32: 1>} : vector<16x128xi32>
    %c64_i32 = arith.constant 64 : i32
    %14 = vector.broadcast %c64_i32 : i32 to vector<16x128xi32>
    %15 = arith.cmpi sge, %13, %14 : vector<16x128xi32>
    %c96_i32 = arith.constant 96 : i32
    %16 = vector.broadcast %c96_i32 : i32 to vector<16x128xi32>
    %17 = arith.cmpi slt, %13, %16 : vector<16x128xi32>
    %18 = arith.andi %15, %17 : vector<16x128xi1>
    %cst_15 = arith.constant 2.000000e+00 : f32
    %cst_16 = arith.constant 1.000000e+00 : f32
    %19 = vector.broadcast %cst_15 : f32 to vector<16x128xf32>
    %20 = vector.broadcast %cst_16 : f32 to vector<16x128xf32>
    %21 = arith.select %18, %19, %20 : vector<16x128xi1>, vector<16x128xf32>
    %cst_17 = arith.constant -1.000000e+00 : f32
    %cst_18 = arith.constant 0.000000e+00 : f32
    %22 = vector.broadcast %cst_17 : f32 to vector<16x128xf32>
    %23 = vector.broadcast %cst_18 : f32 to vector<16x128xf32>
    %24 = arith.select %18, %22, %23 : vector<16x128xi1>, vector<16x128xf32>
    %cst_19 = arith.constant 0.000000e+00 : f32
    %25 = vector.broadcast %cst_19 : f32 to vector<16x32xf32>
    %c0_i32 = arith.constant 0 : i32
    %c16_i32 = arith.constant 16 : i32
    %26 = arith.muli %c0_i32, %c16_i32 : i32
    %27 = tpu.assume_multiple %26, 16 : i32
    %28 = arith.truncf %25 : vector<16x32xf32> to vector<16x32xbf16>
    %cst_20 = arith.constant dense<0.000000e+00> : vector<16x128xf32>
    %29 = tpu.matmul %28, %9, %cst_20 {dimension_numbers = #tpu.dot_dimension_numbers<[1], [0], [0], [1], [0, 0, 1, 1], [], []>} : vector<16x32xbf16>, vector<32x128xbf16>, vector<16x128xf32> -> vector<16x128xf32>
    %30 = arith.index_cast %27 : i32 to index
    %c0_21 = arith.constant 0 : index
    %31 = vector.load %arg16[%30, %c0_21] : memref<128x128xf32, #tpu.memory_space<vmem>>, vector<16x128xf32>
    %32 = arith.truncf %25 : vector<16x32xf32> to vector<16x32xbf16>
    %cst_22 = arith.constant dense<0.000000e+00> : vector<16x128xf32>
    %33 = tpu.matmul %32, %7, %cst_22 {dimension_numbers = #tpu.dot_dimension_numbers<[1], [0], [0], [1], [0, 0, 1, 1], [], []>} : vector<16x32xbf16>, vector<32x128xbf16>, vector<16x128xf32> -> vector<16x128xf32>
    %34 = arith.addf %31, %33 : vector<16x128xf32>
    %35 = arith.negf %34 : vector<16x128xf32>
    %36 = math.exp %35 : vector<16x128xf32>
    %cst_23 = arith.constant 1.000000e+00 : f32
    %37 = vector.broadcast %cst_23 : f32 to vector<16x128xf32>
    %38 = arith.addf %37, %36 : vector<16x128xf32>
    %39 = arith.divf %37, %38 : vector<16x128xf32>
    %40 = arith.mulf %39, %21 : vector<16x128xf32>
    %41 = arith.addf %40, %24 : vector<16x128xf32>
    %42 = vector.extract_strided_slice %41 {offsets = [0, 0], sizes = [16, 32], strides = [1, 1]} : vector<16x128xf32> to vector<16x32xf32>
    %43 = vector.extract_strided_slice %41 {offsets = [0, 32], sizes = [16, 32], strides = [1, 1]} : vector<16x128xf32> to vector<16x32xf32>
    %44 = vector.extract_strided_slice %41 {offsets = [0, 64], sizes = [16, 32], strides = [1, 1]} : vector<16x128xf32> to vector<16x32xf32>
    %45 = vector.extract_strided_slice %41 {offsets = [0, 96], sizes = [16, 32], strides = [1, 1]} : vector<16x128xf32> to vector<16x32xf32>
    %46 = arith.mulf %43, %25 : vector<16x32xf32>
    %47 = arith.mulf %42, %44 : vector<16x32xf32>
    %48 = arith.addf %46, %47 : vector<16x32xf32>
    %49 = math.tanh %48 : vector<16x32xf32>
    %50 = arith.mulf %45, %49 : vector<16x32xf32>
    %51 = arith.truncf %50 : vector<16x32xf32> to vector<16x32xbf16>
    %cst_24 = arith.constant dense<0.000000e+00> : vector<16x128xf32>
    %52 = tpu.matmul %51, %8, %cst_24 {dimension_numbers = #tpu.dot_dimension_numbers<[1], [0], [0], [1], [0, 0, 1, 1], [], []>} : vector<16x32xbf16>, vector<32x128xbf16>, vector<16x128xf32> -> vector<16x128xf32>
    %53 = arith.addf %52, %29 : vector<16x128xf32>
    %54 = arith.addf %53, %12 : vector<16x128xf32>
    %55 = arith.negf %54 : vector<16x128xf32>
    %56 = math.exp %55 : vector<16x128xf32>
    %cst_25 = arith.constant 1.000000e+00 : f32
    %57 = vector.broadcast %cst_25 : f32 to vector<16x128xf32>
    %58 = arith.addf %57, %56 : vector<16x128xf32>
    %59 = arith.divf %57, %58 : vector<16x128xf32>
    %60 = arith.mulf %59, %21 : vector<16x128xf32>
    %61 = arith.addf %60, %24 : vector<16x128xf32>
    %62 = vector.extract_strided_slice %61 {offsets = [0, 0], sizes = [16, 32], strides = [1, 1]} : vector<16x128xf32> to vector<16x32xf32>
    %63 = vector.extract_strided_slice %61 {offsets = [0, 32], sizes = [16, 32], strides = [1, 1]} : vector<16x128xf32> to vector<16x32xf32>
    %64 = vector.extract_strided_slice %61 {offsets = [0, 64], sizes = [16, 32], strides = [1, 1]} : vector<16x128xf32> to vector<16x32xf32>
    %65 = vector.extract_strided_slice %61 {offsets = [0, 96], sizes = [16, 32], strides = [1, 1]} : vector<16x128xf32> to vector<16x32xf32>
    %66 = arith.mulf %63, %25 : vector<16x32xf32>
    %67 = arith.mulf %62, %64 : vector<16x32xf32>
    %68 = arith.addf %66, %67 : vector<16x32xf32>
    %69 = math.tanh %68 : vector<16x32xf32>
    %70 = arith.mulf %65, %69 : vector<16x32xf32>
    %c1_i32 = arith.constant 1 : i32
    %c16_i32_26 = arith.constant 16 : i32
    %71 = arith.muli %c1_i32, %c16_i32_26 : i32
    %72 = tpu.assume_multiple %71, 16 : i32
    %73 = arith.truncf %70 : vector<16x32xf32> to vector<16x32xbf16>
    %cst_27 = arith.constant dense<0.000000e+00> : vector<16x128xf32>
    %74 = tpu.matmul %73, %9, %cst_27 {dimension_numbers = #tpu.dot_dimension_numbers<[1], [0], [0], [1], [0, 0, 1, 1], [], []>} : vector<16x32xbf16>, vector<32x128xbf16>, vector<16x128xf32> -> vector<16x128xf32>
    %75 = arith.index_cast %72 : i32 to index
    %c0_28 = arith.constant 0 : index
    %76 = vector.load %arg16[%75, %c0_28] : memref<128x128xf32, #tpu.memory_space<vmem>>, vector<16x128xf32>
    %77 = arith.truncf %50 : vector<16x32xf32> to vector<16x32xbf16>
    %cst_29 = arith.constant dense<0.000000e+00> : vector<16x128xf32>
    %78 = tpu.matmul %77, %7, %cst_29 {dimension_numbers = #tpu.dot_dimension_numbers<[1], [0], [0], [1], [0, 0, 1, 1], [], []>} : vector<16x32xbf16>, vector<32x128xbf16>, vector<16x128xf32> -> vector<16x128xf32>
    %79 = arith.addf %76, %78 : vector<16x128xf32>
    %80 = arith.negf %79 : vector<16x128xf32>
    %81 = math.exp %80 : vector<16x128xf32>
    %cst_30 = arith.constant 1.000000e+00 : f32
    %82 = vector.broadcast %cst_30 : f32 to vector<16x128xf32>
    %83 = arith.addf %82, %81 : vector<16x128xf32>
    %84 = arith.divf %82, %83 : vector<16x128xf32>
    %85 = arith.mulf %84, %21 : vector<16x128xf32>
    %86 = arith.addf %85, %24 : vector<16x128xf32>
    %87 = vector.extract_strided_slice %86 {offsets = [0, 0], sizes = [16, 32], strides = [1, 1]} : vector<16x128xf32> to vector<16x32xf32>
    %88 = vector.extract_strided_slice %86 {offsets = [0, 32], sizes = [16, 32], strides = [1, 1]} : vector<16x128xf32> to vector<16x32xf32>
    %89 = vector.extract_strided_slice %86 {offsets = [0, 64], sizes = [16, 32], strides = [1, 1]} : vector<16x128xf32> to vector<16x32xf32>
    %90 = vector.extract_strided_slice %86 {offsets = [0, 96], sizes = [16, 32], strides = [1, 1]} : vector<16x128xf32> to vector<16x32xf32>
    %91 = arith.mulf %88, %48 : vector<16x32xf32>
    %92 = arith.mulf %87, %89 : vector<16x32xf32>
    %93 = arith.addf %91, %92 : vector<16x32xf32>
    %94 = math.tanh %93 : vector<16x32xf32>
    %95 = arith.mulf %90, %94 : vector<16x32xf32>
    %96 = arith.truncf %95 : vector<16x32xf32> to vector<16x32xbf16>
    %cst_31 = arith.constant dense<0.000000e+00> : vector<16x128xf32>
    %97 = tpu.matmul %96, %8, %cst_31 {dimension_numbers = #tpu.dot_dimension_numbers<[1], [0], [0], [1], [0, 0, 1, 1], [], []>} : vector<16x32xbf16>, vector<32x128xbf16>, vector<16x128xf32> -> vector<16x128xf32>
    %98 = arith.addf %97, %74 : vector<16x128xf32>
    %99 = arith.addf %98, %12 : vector<16x128xf32>
    %100 = arith.negf %99 : vector<16x128xf32>
    %101 = math.exp %100 : vector<16x128xf32>
    %cst_32 = arith.constant 1.000000e+00 : f32
    %102 = vector.broadcast %cst_32 : f32 to vector<16x128xf32>
    %103 = arith.addf %102, %101 : vector<16x128xf32>
    %104 = arith.divf %102, %103 : vector<16x128xf32>
    %105 = arith.mulf %104, %21 : vector<16x128xf32>
    %106 = arith.addf %105, %24 : vector<16x128xf32>
    %107 = vector.extract_strided_slice %106 {offsets = [0, 0], sizes = [16, 32], strides = [1, 1]} : vector<16x128xf32> to vector<16x32xf32>
    %108 = vector.extract_strided_slice %106 {offsets = [0, 32], sizes = [16, 32], strides = [1, 1]} : vector<16x128xf32> to vector<16x32xf32>
    %109 = vector.extract_strided_slice %106 {offsets = [0, 64], sizes = [16, 32], strides = [1, 1]} : vector<16x128xf32> to vector<16x32xf32>
    %110 = vector.extract_strided_slice %106 {offsets = [0, 96], sizes = [16, 32], strides = [1, 1]} : vector<16x128xf32> to vector<16x32xf32>
    %111 = arith.mulf %108, %68 : vector<16x32xf32>
    %112 = arith.mulf %107, %109 : vector<16x32xf32>
    %113 = arith.addf %111, %112 : vector<16x32xf32>
    %114 = math.tanh %113 : vector<16x32xf32>
    %115 = arith.mulf %110, %114 : vector<16x32xf32>
    %c2_i32 = arith.constant 2 : i32
    %c16_i32_33 = arith.constant 16 : i32
    %116 = arith.muli %c2_i32, %c16_i32_33 : i32
    %117 = tpu.assume_multiple %116, 16 : i32
    %118 = arith.truncf %115 : vector<16x32xf32> to vector<16x32xbf16>
    %cst_34 = arith.constant dense<0.000000e+00> : vector<16x128xf32>
    %119 = tpu.matmul %118, %9, %cst_34 {dimension_numbers = #tpu.dot_dimension_numbers<[1], [0], [0], [1], [0, 0, 1, 1], [], []>} : vector<16x32xbf16>, vector<32x128xbf16>, vector<16x128xf32> -> vector<16x128xf32>
    %120 = arith.index_cast %117 : i32 to index
    %c0_35 = arith.constant 0 : index
    %121 = vector.load %arg16[%120, %c0_35] : memref<128x128xf32, #tpu.memory_space<vmem>>, vector<16x128xf32>
    %122 = arith.truncf %95 : vector<16x32xf32> to vector<16x32xbf16>
    %cst_36 = arith.constant dense<0.000000e+00> : vector<16x128xf32>
    %123 = tpu.matmul %122, %7, %cst_36 {dimension_numbers = #tpu.dot_dimension_numbers<[1], [0], [0], [1], [0, 0, 1, 1], [], []>} : vector<16x32xbf16>, vector<32x128xbf16>, vector<16x128xf32> -> vector<16x128xf32>
    %124 = arith.addf %121, %123 : vector<16x128xf32>
    %125 = arith.negf %124 : vector<16x128xf32>
    %126 = math.exp %125 : vector<16x128xf32>
    %cst_37 = arith.constant 1.000000e+00 : f32
    %127 = vector.broadcast %cst_37 : f32 to vector<16x128xf32>
    %128 = arith.addf %127, %126 : vector<16x128xf32>
    %129 = arith.divf %127, %128 : vector<16x128xf32>
    %130 = arith.mulf %129, %21 : vector<16x128xf32>
    %131 = arith.addf %130, %24 : vector<16x128xf32>
    %132 = vector.extract_strided_slice %131 {offsets = [0, 0], sizes = [16, 32], strides = [1, 1]} : vector<16x128xf32> to vector<16x32xf32>
    %133 = vector.extract_strided_slice %131 {offsets = [0, 32], sizes = [16, 32], strides = [1, 1]} : vector<16x128xf32> to vector<16x32xf32>
    %134 = vector.extract_strided_slice %131 {offsets = [0, 64], sizes = [16, 32], strides = [1, 1]} : vector<16x128xf32> to vector<16x32xf32>
    %135 = vector.extract_strided_slice %131 {offsets = [0, 96], sizes = [16, 32], strides = [1, 1]} : vector<16x128xf32> to vector<16x32xf32>
    %136 = arith.mulf %133, %93 : vector<16x32xf32>
    %137 = arith.mulf %132, %134 : vector<16x32xf32>
    %138 = arith.addf %136, %137 : vector<16x32xf32>
    %139 = math.tanh %138 : vector<16x32xf32>
    %140 = arith.mulf %135, %139 : vector<16x32xf32>
    %141 = arith.truncf %140 : vector<16x32xf32> to vector<16x32xbf16>
    %cst_38 = arith.constant dense<0.000000e+00> : vector<16x128xf32>
    %142 = tpu.matmul %141, %8, %cst_38 {dimension_numbers = #tpu.dot_dimension_numbers<[1], [0], [0], [1], [0, 0, 1, 1], [], []>} : vector<16x32xbf16>, vector<32x128xbf16>, vector<16x128xf32> -> vector<16x128xf32>
    %143 = arith.addf %142, %119 : vector<16x128xf32>
    %144 = arith.addf %143, %12 : vector<16x128xf32>
    %145 = arith.negf %144 : vector<16x128xf32>
    %146 = math.exp %145 : vector<16x128xf32>
    %cst_39 = arith.constant 1.000000e+00 : f32
    %147 = vector.broadcast %cst_39 : f32 to vector<16x128xf32>
    %148 = arith.addf %147, %146 : vector<16x128xf32>
    %149 = arith.divf %147, %148 : vector<16x128xf32>
    %150 = arith.mulf %149, %21 : vector<16x128xf32>
    %151 = arith.addf %150, %24 : vector<16x128xf32>
    %152 = vector.extract_strided_slice %151 {offsets = [0, 0], sizes = [16, 32], strides = [1, 1]} : vector<16x128xf32> to vector<16x32xf32>
    %153 = vector.extract_strided_slice %151 {offsets = [0, 32], sizes = [16, 32], strides = [1, 1]} : vector<16x128xf32> to vector<16x32xf32>
    %154 = vector.extract_strided_slice %151 {offsets = [0, 64], sizes = [16, 32], strides = [1, 1]} : vector<16x128xf32> to vector<16x32xf32>
    %155 = vector.extract_strided_slice %151 {offsets = [0, 96], sizes = [16, 32], strides = [1, 1]} : vector<16x128xf32> to vector<16x32xf32>
    %156 = arith.mulf %153, %113 : vector<16x32xf32>
    %157 = arith.mulf %152, %154 : vector<16x32xf32>
    %158 = arith.addf %156, %157 : vector<16x32xf32>
    %159 = math.tanh %158 : vector<16x32xf32>
    %160 = arith.mulf %155, %159 : vector<16x32xf32>
    %c3_i32 = arith.constant 3 : i32
    %c16_i32_40 = arith.constant 16 : i32
    %161 = arith.muli %c3_i32, %c16_i32_40 : i32
    %162 = tpu.assume_multiple %161, 16 : i32
    %163 = arith.truncf %160 : vector<16x32xf32> to vector<16x32xbf16>
    %cst_41 = arith.constant dense<0.000000e+00> : vector<16x128xf32>
    %164 = tpu.matmul %163, %9, %cst_41 {dimension_numbers = #tpu.dot_dimension_numbers<[1], [0], [0], [1], [0, 0, 1, 1], [], []>} : vector<16x32xbf16>, vector<32x128xbf16>, vector<16x128xf32> -> vector<16x128xf32>
    %165 = arith.index_cast %162 : i32 to index
    %c0_42 = arith.constant 0 : index
    %166 = vector.load %arg16[%165, %c0_42] : memref<128x128xf32, #tpu.memory_space<vmem>>, vector<16x128xf32>
    %167 = arith.truncf %140 : vector<16x32xf32> to vector<16x32xbf16>
    %cst_43 = arith.constant dense<0.000000e+00> : vector<16x128xf32>
    %168 = tpu.matmul %167, %7, %cst_43 {dimension_numbers = #tpu.dot_dimension_numbers<[1], [0], [0], [1], [0, 0, 1, 1], [], []>} : vector<16x32xbf16>, vector<32x128xbf16>, vector<16x128xf32> -> vector<16x128xf32>
    %169 = arith.addf %166, %168 : vector<16x128xf32>
    %170 = arith.negf %169 : vector<16x128xf32>
    %171 = math.exp %170 : vector<16x128xf32>
    %cst_44 = arith.constant 1.000000e+00 : f32
    %172 = vector.broadcast %cst_44 : f32 to vector<16x128xf32>
    %173 = arith.addf %172, %171 : vector<16x128xf32>
    %174 = arith.divf %172, %173 : vector<16x128xf32>
    %175 = arith.mulf %174, %21 : vector<16x128xf32>
    %176 = arith.addf %175, %24 : vector<16x128xf32>
    %177 = vector.extract_strided_slice %176 {offsets = [0, 0], sizes = [16, 32], strides = [1, 1]} : vector<16x128xf32> to vector<16x32xf32>
    %178 = vector.extract_strided_slice %176 {offsets = [0, 32], sizes = [16, 32], strides = [1, 1]} : vector<16x128xf32> to vector<16x32xf32>
    %179 = vector.extract_strided_slice %176 {offsets = [0, 64], sizes = [16, 32], strides = [1, 1]} : vector<16x128xf32> to vector<16x32xf32>
    %180 = vector.extract_strided_slice %176 {offsets = [0, 96], sizes = [16, 32], strides = [1, 1]} : vector<16x128xf32> to vector<16x32xf32>
    %181 = arith.mulf %178, %138 : vector<16x32xf32>
    %182 = arith.mulf %177, %179 : vector<16x32xf32>
    %183 = arith.addf %181, %182 : vector<16x32xf32>
    %184 = math.tanh %183 : vector<16x32xf32>
    %185 = arith.mulf %180, %184 : vector<16x32xf32>
    %186 = arith.truncf %185 : vector<16x32xf32> to vector<16x32xbf16>
    %cst_45 = arith.constant dense<0.000000e+00> : vector<16x128xf32>
    %187 = tpu.matmul %186, %8, %cst_45 {dimension_numbers = #tpu.dot_dimension_numbers<[1], [0], [0], [1], [0, 0, 1, 1], [], []>} : vector<16x32xbf16>, vector<32x128xbf16>, vector<16x128xf32> -> vector<16x128xf32>
    %188 = arith.addf %187, %164 : vector<16x128xf32>
    %189 = arith.addf %188, %12 : vector<16x128xf32>
    %190 = arith.negf %189 : vector<16x128xf32>
    %191 = math.exp %190 : vector<16x128xf32>
    %cst_46 = arith.constant 1.000000e+00 : f32
    %192 = vector.broadcast %cst_46 : f32 to vector<16x128xf32>
    %193 = arith.addf %192, %191 : vector<16x128xf32>
    %194 = arith.divf %192, %193 : vector<16x128xf32>
    %195 = arith.mulf %194, %21 : vector<16x128xf32>
    %196 = arith.addf %195, %24 : vector<16x128xf32>
    %197 = vector.extract_strided_slice %196 {offsets = [0, 0], sizes = [16, 32], strides = [1, 1]} : vector<16x128xf32> to vector<16x32xf32>
    %198 = vector.extract_strided_slice %196 {offsets = [0, 32], sizes = [16, 32], strides = [1, 1]} : vector<16x128xf32> to vector<16x32xf32>
    %199 = vector.extract_strided_slice %196 {offsets = [0, 64], sizes = [16, 32], strides = [1, 1]} : vector<16x128xf32> to vector<16x32xf32>
    %200 = vector.extract_strided_slice %196 {offsets = [0, 96], sizes = [16, 32], strides = [1, 1]} : vector<16x128xf32> to vector<16x32xf32>
    %201 = arith.mulf %198, %158 : vector<16x32xf32>
    %202 = arith.mulf %197, %199 : vector<16x32xf32>
    %203 = arith.addf %201, %202 : vector<16x32xf32>
    %204 = math.tanh %203 : vector<16x32xf32>
    %205 = arith.mulf %200, %204 : vector<16x32xf32>
    %c4_i32 = arith.constant 4 : i32
    %c16_i32_47 = arith.constant 16 : i32
    %206 = arith.muli %c4_i32, %c16_i32_47 : i32
    %207 = tpu.assume_multiple %206, 16 : i32
    %208 = arith.truncf %205 : vector<16x32xf32> to vector<16x32xbf16>
    %cst_48 = arith.constant dense<0.000000e+00> : vector<16x128xf32>
    %209 = tpu.matmul %208, %9, %cst_48 {dimension_numbers = #tpu.dot_dimension_numbers<[1], [0], [0], [1], [0, 0, 1, 1], [], []>} : vector<16x32xbf16>, vector<32x128xbf16>, vector<16x128xf32> -> vector<16x128xf32>
    %210 = arith.index_cast %207 : i32 to index
    %c0_49 = arith.constant 0 : index
    %211 = vector.load %arg16[%210, %c0_49] : memref<128x128xf32, #tpu.memory_space<vmem>>, vector<16x128xf32>
    %212 = arith.truncf %185 : vector<16x32xf32> to vector<16x32xbf16>
    %cst_50 = arith.constant dense<0.000000e+00> : vector<16x128xf32>
    %213 = tpu.matmul %212, %7, %cst_50 {dimension_numbers = #tpu.dot_dimension_numbers<[1], [0], [0], [1], [0, 0, 1, 1], [], []>} : vector<16x32xbf16>, vector<32x128xbf16>, vector<16x128xf32> -> vector<16x128xf32>
    %214 = arith.addf %211, %213 : vector<16x128xf32>
    %215 = arith.negf %214 : vector<16x128xf32>
    %216 = math.exp %215 : vector<16x128xf32>
    %cst_51 = arith.constant 1.000000e+00 : f32
    %217 = vector.broadcast %cst_51 : f32 to vector<16x128xf32>
    %218 = arith.addf %217, %216 : vector<16x128xf32>
    %219 = arith.divf %217, %218 : vector<16x128xf32>
    %220 = arith.mulf %219, %21 : vector<16x128xf32>
    %221 = arith.addf %220, %24 : vector<16x128xf32>
    %222 = vector.extract_strided_slice %221 {offsets = [0, 0], sizes = [16, 32], strides = [1, 1]} : vector<16x128xf32> to vector<16x32xf32>
    %223 = vector.extract_strided_slice %221 {offsets = [0, 32], sizes = [16, 32], strides = [1, 1]} : vector<16x128xf32> to vector<16x32xf32>
    %224 = vector.extract_strided_slice %221 {offsets = [0, 64], sizes = [16, 32], strides = [1, 1]} : vector<16x128xf32> to vector<16x32xf32>
    %225 = vector.extract_strided_slice %221 {offsets = [0, 96], sizes = [16, 32], strides = [1, 1]} : vector<16x128xf32> to vector<16x32xf32>
    %226 = arith.mulf %223, %183 : vector<16x32xf32>
    %227 = arith.mulf %222, %224 : vector<16x32xf32>
    %228 = arith.addf %226, %227 : vector<16x32xf32>
    %229 = math.tanh %228 : vector<16x32xf32>
    %230 = arith.mulf %225, %229 : vector<16x32xf32>
    %231 = arith.truncf %230 : vector<16x32xf32> to vector<16x32xbf16>
    %cst_52 = arith.constant dense<0.000000e+00> : vector<16x128xf32>
    %232 = tpu.matmul %231, %8, %cst_52 {dimension_numbers = #tpu.dot_dimension_numbers<[1], [0], [0], [1], [0, 0, 1, 1], [], []>} : vector<16x32xbf16>, vector<32x128xbf16>, vector<16x128xf32> -> vector<16x128xf32>
    %233 = arith.addf %232, %209 : vector<16x128xf32>
    %234 = arith.addf %233, %12 : vector<16x128xf32>
    %235 = arith.negf %234 : vector<16x128xf32>
    %236 = math.exp %235 : vector<16x128xf32>
    %cst_53 = arith.constant 1.000000e+00 : f32
    %237 = vector.broadcast %cst_53 : f32 to vector<16x128xf32>
    %238 = arith.addf %237, %236 : vector<16x128xf32>
    %239 = arith.divf %237, %238 : vector<16x128xf32>
    %240 = arith.mulf %239, %21 : vector<16x128xf32>
    %241 = arith.addf %240, %24 : vector<16x128xf32>
    %242 = vector.extract_strided_slice %241 {offsets = [0, 0], sizes = [16, 32], strides = [1, 1]} : vector<16x128xf32> to vector<16x32xf32>
    %243 = vector.extract_strided_slice %241 {offsets = [0, 32], sizes = [16, 32], strides = [1, 1]} : vector<16x128xf32> to vector<16x32xf32>
    %244 = vector.extract_strided_slice %241 {offsets = [0, 64], sizes = [16, 32], strides = [1, 1]} : vector<16x128xf32> to vector<16x32xf32>
    %245 = vector.extract_strided_slice %241 {offsets = [0, 96], sizes = [16, 32], strides = [1, 1]} : vector<16x128xf32> to vector<16x32xf32>
    %246 = arith.mulf %243, %203 : vector<16x32xf32>
    %247 = arith.mulf %242, %244 : vector<16x32xf32>
    %248 = arith.addf %246, %247 : vector<16x32xf32>
    %249 = math.tanh %248 : vector<16x32xf32>
    %250 = arith.mulf %245, %249 : vector<16x32xf32>
    %c5_i32 = arith.constant 5 : i32
    %c16_i32_54 = arith.constant 16 : i32
    %251 = arith.muli %c5_i32, %c16_i32_54 : i32
    %252 = tpu.assume_multiple %251, 16 : i32
    %253 = arith.truncf %250 : vector<16x32xf32> to vector<16x32xbf16>
    %cst_55 = arith.constant dense<0.000000e+00> : vector<16x128xf32>
    %254 = tpu.matmul %253, %9, %cst_55 {dimension_numbers = #tpu.dot_dimension_numbers<[1], [0], [0], [1], [0, 0, 1, 1], [], []>} : vector<16x32xbf16>, vector<32x128xbf16>, vector<16x128xf32> -> vector<16x128xf32>
    %255 = arith.index_cast %252 : i32 to index
    %c0_56 = arith.constant 0 : index
    %256 = vector.load %arg16[%255, %c0_56] : memref<128x128xf32, #tpu.memory_space<vmem>>, vector<16x128xf32>
    %257 = arith.truncf %230 : vector<16x32xf32> to vector<16x32xbf16>
    %cst_57 = arith.constant dense<0.000000e+00> : vector<16x128xf32>
    %258 = tpu.matmul %257, %7, %cst_57 {dimension_numbers = #tpu.dot_dimension_numbers<[1], [0], [0], [1], [0, 0, 1, 1], [], []>} : vector<16x32xbf16>, vector<32x128xbf16>, vector<16x128xf32> -> vector<16x128xf32>
    %259 = arith.addf %256, %258 : vector<16x128xf32>
    %260 = arith.negf %259 : vector<16x128xf32>
    %261 = math.exp %260 : vector<16x128xf32>
    %cst_58 = arith.constant 1.000000e+00 : f32
    %262 = vector.broadcast %cst_58 : f32 to vector<16x128xf32>
    %263 = arith.addf %262, %261 : vector<16x128xf32>
    %264 = arith.divf %262, %263 : vector<16x128xf32>
    %265 = arith.mulf %264, %21 : vector<16x128xf32>
    %266 = arith.addf %265, %24 : vector<16x128xf32>
    %267 = vector.extract_strided_slice %266 {offsets = [0, 0], sizes = [16, 32], strides = [1, 1]} : vector<16x128xf32> to vector<16x32xf32>
    %268 = vector.extract_strided_slice %266 {offsets = [0, 32], sizes = [16, 32], strides = [1, 1]} : vector<16x128xf32> to vector<16x32xf32>
    %269 = vector.extract_strided_slice %266 {offsets = [0, 64], sizes = [16, 32], strides = [1, 1]} : vector<16x128xf32> to vector<16x32xf32>
    %270 = vector.extract_strided_slice %266 {offsets = [0, 96], sizes = [16, 32], strides = [1, 1]} : vector<16x128xf32> to vector<16x32xf32>
    %271 = arith.mulf %268, %228 : vector<16x32xf32>
    %272 = arith.mulf %267, %269 : vector<16x32xf32>
    %273 = arith.addf %271, %272 : vector<16x32xf32>
    %274 = math.tanh %273 : vector<16x32xf32>
    %275 = arith.mulf %270, %274 : vector<16x32xf32>
    %276 = arith.truncf %275 : vector<16x32xf32> to vector<16x32xbf16>
    %cst_59 = arith.constant dense<0.000000e+00> : vector<16x128xf32>
    %277 = tpu.matmul %276, %8, %cst_59 {dimension_numbers = #tpu.dot_dimension_numbers<[1], [0], [0], [1], [0, 0, 1, 1], [], []>} : vector<16x32xbf16>, vector<32x128xbf16>, vector<16x128xf32> -> vector<16x128xf32>
    %278 = arith.addf %277, %254 : vector<16x128xf32>
    %279 = arith.addf %278, %12 : vector<16x128xf32>
    %280 = arith.negf %279 : vector<16x128xf32>
    %281 = math.exp %280 : vector<16x128xf32>
    %cst_60 = arith.constant 1.000000e+00 : f32
    %282 = vector.broadcast %cst_60 : f32 to vector<16x128xf32>
    %283 = arith.addf %282, %281 : vector<16x128xf32>
    %284 = arith.divf %282, %283 : vector<16x128xf32>
    %285 = arith.mulf %284, %21 : vector<16x128xf32>
    %286 = arith.addf %285, %24 : vector<16x128xf32>
    %287 = vector.extract_strided_slice %286 {offsets = [0, 0], sizes = [16, 32], strides = [1, 1]} : vector<16x128xf32> to vector<16x32xf32>
    %288 = vector.extract_strided_slice %286 {offsets = [0, 32], sizes = [16, 32], strides = [1, 1]} : vector<16x128xf32> to vector<16x32xf32>
    %289 = vector.extract_strided_slice %286 {offsets = [0, 64], sizes = [16, 32], strides = [1, 1]} : vector<16x128xf32> to vector<16x32xf32>
    %290 = vector.extract_strided_slice %286 {offsets = [0, 96], sizes = [16, 32], strides = [1, 1]} : vector<16x128xf32> to vector<16x32xf32>
    %291 = arith.mulf %288, %248 : vector<16x32xf32>
    %292 = arith.mulf %287, %289 : vector<16x32xf32>
    %293 = arith.addf %291, %292 : vector<16x32xf32>
    %294 = math.tanh %293 : vector<16x32xf32>
    %295 = arith.mulf %290, %294 : vector<16x32xf32>
    %c6_i32 = arith.constant 6 : i32
    %c16_i32_61 = arith.constant 16 : i32
    %296 = arith.muli %c6_i32, %c16_i32_61 : i32
    %297 = tpu.assume_multiple %296, 16 : i32
    %298 = arith.truncf %295 : vector<16x32xf32> to vector<16x32xbf16>
    %cst_62 = arith.constant dense<0.000000e+00> : vector<16x128xf32>
    %299 = tpu.matmul %298, %9, %cst_62 {dimension_numbers = #tpu.dot_dimension_numbers<[1], [0], [0], [1], [0, 0, 1, 1], [], []>} : vector<16x32xbf16>, vector<32x128xbf16>, vector<16x128xf32> -> vector<16x128xf32>
    %300 = arith.index_cast %297 : i32 to index
    %c0_63 = arith.constant 0 : index
    %301 = vector.load %arg16[%300, %c0_63] : memref<128x128xf32, #tpu.memory_space<vmem>>, vector<16x128xf32>
    %302 = arith.truncf %275 : vector<16x32xf32> to vector<16x32xbf16>
    %cst_64 = arith.constant dense<0.000000e+00> : vector<16x128xf32>
    %303 = tpu.matmul %302, %7, %cst_64 {dimension_numbers = #tpu.dot_dimension_numbers<[1], [0], [0], [1], [0, 0, 1, 1], [], []>} : vector<16x32xbf16>, vector<32x128xbf16>, vector<16x128xf32> -> vector<16x128xf32>
    %304 = arith.addf %301, %303 : vector<16x128xf32>
    %305 = arith.negf %304 : vector<16x128xf32>
    %306 = math.exp %305 : vector<16x128xf32>
    %cst_65 = arith.constant 1.000000e+00 : f32
    %307 = vector.broadcast %cst_65 : f32 to vector<16x128xf32>
    %308 = arith.addf %307, %306 : vector<16x128xf32>
    %309 = arith.divf %307, %308 : vector<16x128xf32>
    %310 = arith.mulf %309, %21 : vector<16x128xf32>
    %311 = arith.addf %310, %24 : vector<16x128xf32>
    %312 = vector.extract_strided_slice %311 {offsets = [0, 0], sizes = [16, 32], strides = [1, 1]} : vector<16x128xf32> to vector<16x32xf32>
    %313 = vector.extract_strided_slice %311 {offsets = [0, 32], sizes = [16, 32], strides = [1, 1]} : vector<16x128xf32> to vector<16x32xf32>
    %314 = vector.extract_strided_slice %311 {offsets = [0, 64], sizes = [16, 32], strides = [1, 1]} : vector<16x128xf32> to vector<16x32xf32>
    %315 = vector.extract_strided_slice %311 {offsets = [0, 96], sizes = [16, 32], strides = [1, 1]} : vector<16x128xf32> to vector<16x32xf32>
    %316 = arith.mulf %313, %273 : vector<16x32xf32>
    %317 = arith.mulf %312, %314 : vector<16x32xf32>
    %318 = arith.addf %316, %317 : vector<16x32xf32>
    %319 = math.tanh %318 : vector<16x32xf32>
    %320 = arith.mulf %315, %319 : vector<16x32xf32>
    %321 = arith.truncf %320 : vector<16x32xf32> to vector<16x32xbf16>
    %cst_66 = arith.constant dense<0.000000e+00> : vector<16x128xf32>
    %322 = tpu.matmul %321, %8, %cst_66 {dimension_numbers = #tpu.dot_dimension_numbers<[1], [0], [0], [1], [0, 0, 1, 1], [], []>} : vector<16x32xbf16>, vector<32x128xbf16>, vector<16x128xf32> -> vector<16x128xf32>
    %323 = arith.addf %322, %299 : vector<16x128xf32>
    %324 = arith.addf %323, %12 : vector<16x128xf32>
    %325 = arith.negf %324 : vector<16x128xf32>
    %326 = math.exp %325 : vector<16x128xf32>
    %cst_67 = arith.constant 1.000000e+00 : f32
    %327 = vector.broadcast %cst_67 : f32 to vector<16x128xf32>
    %328 = arith.addf %327, %326 : vector<16x128xf32>
    %329 = arith.divf %327, %328 : vector<16x128xf32>
    %330 = arith.mulf %329, %21 : vector<16x128xf32>
    %331 = arith.addf %330, %24 : vector<16x128xf32>
    %332 = vector.extract_strided_slice %331 {offsets = [0, 0], sizes = [16, 32], strides = [1, 1]} : vector<16x128xf32> to vector<16x32xf32>
    %333 = vector.extract_strided_slice %331 {offsets = [0, 32], sizes = [16, 32], strides = [1, 1]} : vector<16x128xf32> to vector<16x32xf32>
    %334 = vector.extract_strided_slice %331 {offsets = [0, 64], sizes = [16, 32], strides = [1, 1]} : vector<16x128xf32> to vector<16x32xf32>
    %335 = vector.extract_strided_slice %331 {offsets = [0, 96], sizes = [16, 32], strides = [1, 1]} : vector<16x128xf32> to vector<16x32xf32>
    %336 = arith.mulf %333, %293 : vector<16x32xf32>
    %337 = arith.mulf %332, %334 : vector<16x32xf32>
    %338 = arith.addf %336, %337 : vector<16x32xf32>
    %339 = math.tanh %338 : vector<16x32xf32>
    %340 = arith.mulf %335, %339 : vector<16x32xf32>
    %c7_i32 = arith.constant 7 : i32
    %c16_i32_68 = arith.constant 16 : i32
    %341 = arith.muli %c7_i32, %c16_i32_68 : i32
    %342 = tpu.assume_multiple %341, 16 : i32
    %343 = arith.truncf %340 : vector<16x32xf32> to vector<16x32xbf16>
    %cst_69 = arith.constant dense<0.000000e+00> : vector<16x128xf32>
    %344 = tpu.matmul %343, %9, %cst_69 {dimension_numbers = #tpu.dot_dimension_numbers<[1], [0], [0], [1], [0, 0, 1, 1], [], []>} : vector<16x32xbf16>, vector<32x128xbf16>, vector<16x128xf32> -> vector<16x128xf32>
    %345 = arith.index_cast %342 : i32 to index
    %c0_70 = arith.constant 0 : index
    %346 = vector.load %arg16[%345, %c0_70] : memref<128x128xf32, #tpu.memory_space<vmem>>, vector<16x128xf32>
    %347 = arith.truncf %320 : vector<16x32xf32> to vector<16x32xbf16>
    %cst_71 = arith.constant dense<0.000000e+00> : vector<16x128xf32>
    %348 = tpu.matmul %347, %7, %cst_71 {dimension_numbers = #tpu.dot_dimension_numbers<[1], [0], [0], [1], [0, 0, 1, 1], [], []>} : vector<16x32xbf16>, vector<32x128xbf16>, vector<16x128xf32> -> vector<16x128xf32>
    %349 = arith.addf %346, %348 : vector<16x128xf32>
    %350 = arith.negf %349 : vector<16x128xf32>
    %351 = math.exp %350 : vector<16x128xf32>
    %cst_72 = arith.constant 1.000000e+00 : f32
    %352 = vector.broadcast %cst_72 : f32 to vector<16x128xf32>
    %353 = arith.addf %352, %351 : vector<16x128xf32>
    %354 = arith.divf %352, %353 : vector<16x128xf32>
    %355 = arith.mulf %354, %21 : vector<16x128xf32>
    %356 = arith.addf %355, %24 : vector<16x128xf32>
    %357 = vector.extract_strided_slice %356 {offsets = [0, 0], sizes = [16, 32], strides = [1, 1]} : vector<16x128xf32> to vector<16x32xf32>
    %358 = vector.extract_strided_slice %356 {offsets = [0, 32], sizes = [16, 32], strides = [1, 1]} : vector<16x128xf32> to vector<16x32xf32>
    %359 = vector.extract_strided_slice %356 {offsets = [0, 64], sizes = [16, 32], strides = [1, 1]} : vector<16x128xf32> to vector<16x32xf32>
    %360 = vector.extract_strided_slice %356 {offsets = [0, 96], sizes = [16, 32], strides = [1, 1]} : vector<16x128xf32> to vector<16x32xf32>
    %361 = arith.mulf %358, %318 : vector<16x32xf32>
    %362 = arith.mulf %357, %359 : vector<16x32xf32>
    %363 = arith.addf %361, %362 : vector<16x32xf32>
    %364 = math.tanh %363 : vector<16x32xf32>
    %365 = arith.mulf %360, %364 : vector<16x32xf32>
    %366 = arith.truncf %365 : vector<16x32xf32> to vector<16x32xbf16>
    %cst_73 = arith.constant dense<0.000000e+00> : vector<16x128xf32>
    %367 = tpu.matmul %366, %8, %cst_73 {dimension_numbers = #tpu.dot_dimension_numbers<[1], [0], [0], [1], [0, 0, 1, 1], [], []>} : vector<16x32xbf16>, vector<32x128xbf16>, vector<16x128xf32> -> vector<16x128xf32>
    %368 = arith.addf %367, %344 : vector<16x128xf32>
    %369 = arith.addf %368, %12 : vector<16x128xf32>
    %370 = arith.negf %369 : vector<16x128xf32>
    %371 = math.exp %370 : vector<16x128xf32>
    %cst_74 = arith.constant 1.000000e+00 : f32
    %372 = vector.broadcast %cst_74 : f32 to vector<16x128xf32>
    %373 = arith.addf %372, %371 : vector<16x128xf32>
    %374 = arith.divf %372, %373 : vector<16x128xf32>
    %375 = arith.mulf %374, %21 : vector<16x128xf32>
    %376 = arith.addf %375, %24 : vector<16x128xf32>
    %377 = vector.extract_strided_slice %376 {offsets = [0, 0], sizes = [16, 32], strides = [1, 1]} : vector<16x128xf32> to vector<16x32xf32>
    %378 = vector.extract_strided_slice %376 {offsets = [0, 32], sizes = [16, 32], strides = [1, 1]} : vector<16x128xf32> to vector<16x32xf32>
    %379 = vector.extract_strided_slice %376 {offsets = [0, 64], sizes = [16, 32], strides = [1, 1]} : vector<16x128xf32> to vector<16x32xf32>
    %380 = vector.extract_strided_slice %376 {offsets = [0, 96], sizes = [16, 32], strides = [1, 1]} : vector<16x128xf32> to vector<16x32xf32>
    %381 = arith.mulf %378, %338 : vector<16x32xf32>
    %382 = arith.mulf %377, %379 : vector<16x32xf32>
    %383 = arith.addf %381, %382 : vector<16x32xf32>
    %384 = math.tanh %383 : vector<16x32xf32>
    %385 = arith.mulf %380, %384 : vector<16x32xf32>
    %c8_i32 = arith.constant 8 : i32
    %386 = arith.truncf %385 : vector<16x32xf32> to vector<16x32xbf16>
    %c0_75 = arith.constant 0 : index
    %c0_76 = arith.constant 0 : index
    %387 = vector.load %arg7[%c0_75, %c0_76] : memref<32x128xbf16, #tpu.memory_space<vmem>>, vector<32x128xbf16>
    %cst_77 = arith.constant dense<0.000000e+00> : vector<16x128xf32>
    %388 = tpu.matmul %386, %387, %cst_77 {dimension_numbers = #tpu.dot_dimension_numbers<[1], [0], [0], [1], [0, 0, 1, 1], [], []>} : vector<16x32xbf16>, vector<32x128xbf16>, vector<16x128xf32> -> vector<16x128xf32>
    %c0_78 = arith.constant 0 : index
    %c0_79 = arith.constant 0 : index
    %389 = vector.load %arg8[%c0_78, %c0_79] : memref<1x128xf32, #tpu.memory_space<vmem>>, vector<1x128xf32>
    %390 = vector.broadcast %389 : vector<1x128xf32> to vector<16x128xf32>
    %391 = arith.addf %388, %390 : vector<16x128xf32>
    %cst_80 = arith.constant 0.000000e+00 : f32
    %392 = vector.broadcast %cst_80 : f32 to vector<16x128xf32>
    %393 = arith.maximumf %391, %392 : vector<16x128xf32>
    %394 = math.absf %391 : vector<16x128xf32>
    %cst_81 = arith.constant 0.000000e+00 : f32
    %395 = vector.broadcast %cst_81 : f32 to vector<16x128xf32>
    %396 = arith.subf %395, %394 : vector<16x128xf32>
    %397 = math.exp %396 : vector<16x128xf32>
    %cst_82 = arith.constant 1.000000e+00 : f32
    %398 = vector.broadcast %cst_82 : f32 to vector<16x128xf32>
    %399 = arith.addf %398, %397 : vector<16x128xf32>
    %400 = math.log %399 : vector<16x128xf32>
    %401 = arith.addf %393, %400 : vector<16x128xf32>
    %402 = math.tanh %401 : vector<16x128xf32>
    %403 = arith.mulf %391, %402 : vector<16x128xf32>
    %404 = arith.truncf %403 : vector<16x128xf32> to vector<16x128xbf16>
    %c0_83 = arith.constant 0 : index
    %c0_84 = arith.constant 0 : index
    %405 = vector.load %arg9[%c0_83, %c0_84] : memref<128x128xbf16, #tpu.memory_space<vmem>>, vector<128x128xbf16>
    %cst_85 = arith.constant dense<0.000000e+00> : vector<16x128xf32>
    %406 = tpu.matmul %404, %405, %cst_85 {dimension_numbers = #tpu.dot_dimension_numbers<[1], [0], [0], [1], [0, 0, 1, 1], [], []>} : vector<16x128xbf16>, vector<128x128xbf16>, vector<16x128xf32> -> vector<16x128xf32>
    %c0_86 = arith.constant 0 : index
    %c0_87 = arith.constant 0 : index
    %407 = vector.load %arg10[%c0_86, %c0_87] : memref<1x128xf32, #tpu.memory_space<vmem>>, vector<1x128xf32>
    %408 = vector.broadcast %407 : vector<1x128xf32> to vector<16x128xf32>
    %409 = arith.addf %406, %408 : vector<16x128xf32>
    %cst_88 = arith.constant 0.000000e+00 : f32
    %410 = vector.broadcast %cst_88 : f32 to vector<16x128xf32>
    %411 = arith.maximumf %409, %410 : vector<16x128xf32>
    %412 = math.absf %409 : vector<16x128xf32>
    %cst_89 = arith.constant 0.000000e+00 : f32
    %413 = vector.broadcast %cst_89 : f32 to vector<16x128xf32>
    %414 = arith.subf %413, %412 : vector<16x128xf32>
    %415 = math.exp %414 : vector<16x128xf32>
    %cst_90 = arith.constant 1.000000e+00 : f32
    %416 = vector.broadcast %cst_90 : f32 to vector<16x128xf32>
    %417 = arith.addf %416, %415 : vector<16x128xf32>
    %418 = math.log %417 : vector<16x128xf32>
    %419 = arith.addf %411, %418 : vector<16x128xf32>
    %420 = math.tanh %419 : vector<16x128xf32>
    %421 = arith.mulf %409, %420 : vector<16x128xf32>
    %422 = arith.truncf %421 : vector<16x128xf32> to vector<16x128xbf16>
    %c0_91 = arith.constant 0 : index
    %c0_92 = arith.constant 0 : index
    %423 = vector.load %arg11[%c0_91, %c0_92] : memref<128x128xbf16, #tpu.memory_space<vmem>>, vector<128x128xbf16>
    %cst_93 = arith.constant dense<0.000000e+00> : vector<16x128xf32>
    %424 = tpu.matmul %422, %423, %cst_93 {dimension_numbers = #tpu.dot_dimension_numbers<[1], [0], [0], [1], [0, 0, 1, 1], [], []>} : vector<16x128xbf16>, vector<128x128xbf16>, vector<16x128xf32> -> vector<16x128xf32>
    %c0_94 = arith.constant 0 : index
    %c0_95 = arith.constant 0 : index
    %425 = vector.load %arg12[%c0_94, %c0_95] : memref<1x128xf32, #tpu.memory_space<vmem>>, vector<1x128xf32>
    %426 = vector.broadcast %425 : vector<1x128xf32> to vector<16x128xf32>
    %427 = arith.addf %424, %426 : vector<16x128xf32>
    %cst_96 = arith.constant 0.000000e+00 : f32
    %428 = vector.broadcast %cst_96 : f32 to vector<16x128xf32>
    %429 = arith.maximumf %427, %428 : vector<16x128xf32>
    %430 = math.absf %427 : vector<16x128xf32>
    %cst_97 = arith.constant 0.000000e+00 : f32
    %431 = vector.broadcast %cst_97 : f32 to vector<16x128xf32>
    %432 = arith.subf %431, %430 : vector<16x128xf32>
    %433 = math.exp %432 : vector<16x128xf32>
    %cst_98 = arith.constant 1.000000e+00 : f32
    %434 = vector.broadcast %cst_98 : f32 to vector<16x128xf32>
    %435 = arith.addf %434, %433 : vector<16x128xf32>
    %436 = math.log %435 : vector<16x128xf32>
    %437 = arith.addf %429, %436 : vector<16x128xf32>
    %438 = math.tanh %437 : vector<16x128xf32>
    %439 = arith.mulf %427, %438 : vector<16x128xf32>
    %440 = arith.truncf %439 : vector<16x128xf32> to vector<16x128xbf16>
    %c0_99 = arith.constant 0 : index
    %c0_100 = arith.constant 0 : index
    %441 = vector.load %arg13[%c0_99, %c0_100] : memref<128x128xbf16, #tpu.memory_space<vmem>>, vector<128x128xbf16>
    %cst_101 = arith.constant dense<0.000000e+00> : vector<16x128xf32>
    %442 = tpu.matmul %440, %441, %cst_101 {dimension_numbers = #tpu.dot_dimension_numbers<[1], [0], [0], [1], [0, 0, 1, 1], [], []>} : vector<16x128xbf16>, vector<128x128xbf16>, vector<16x128xf32> -> vector<16x128xf32>
    %c0_102 = arith.constant 0 : index
    %c0_103 = arith.constant 0 : index
    %443 = vector.load %arg14[%c0_102, %c0_103] : memref<1x128xf32, #tpu.memory_space<vmem>>, vector<1x128xf32>
    %444 = vector.broadcast %443 : vector<1x128xf32> to vector<16x128xf32>
    %445 = arith.addf %442, %444 : vector<16x128xf32>
    %c0_104 = arith.constant 0 : index
    %c0_105 = arith.constant 0 : index
    %446 = vector.load %arg15[%c0_104, %c0_105] : memref<16x128xf32, #tpu.memory_space<vmem>>, vector<16x128xf32>
    tpu.vector_store %arg15[%c0_104, %c0_105], %445 {strides = array<i32>} : memref<16x128xf32, #tpu.memory_space<vmem>>, vector<16x128xf32>,
    return
  }
}

</mosaic_0001>

<llo_original>
// kernel: tpu_custom_call.1
$region0: #{tpu_custom_call.1}
  #allocation0 [shape = 'u32[]', space=smem, size = 0x4, offset = 0x4, fixed_abs, tag = 'smem constant byte address 0x4 - core index']
  #allocation1 [shape = 'u32[72,128]{1,0:T(1,128)}', space=vmem, size = 0x9000, scoped, tag = 'internal scratch']
  #allocation2 [shape = 'f32[128,128]{1,0:T(8,128)}', space=vmem, size = 0x10000, scoped, tag = 'scratch operand']
  %s0 = inlined_call_operand.vmem [shape: bf16[128,16], index: 0, kind: input, shape index: {}]
  %s1 = inlined_call_operand.hbm [shape: bf16[16,128], index: 1, kind: input, shape index: {}]
  %s2 = inlined_call_operand.vmem [shape: bf16[32,128], index: 2, kind: input, shape index: {}]
  %s3 = inlined_call_operand.hbm [shape: f32[1,128], index: 3, kind: input, shape index: {}]
  %s4 = inlined_call_operand.hbm [shape: bf16[32,128], index: 4, kind: input, shape index: {}]
  %s5 = inlined_call_operand.hbm [shape: bf16[32,128], index: 5, kind: input, shape index: {}]
  %s6 = inlined_call_operand.hbm [shape: f32[1,128], index: 6, kind: input, shape index: {}]
  %s7 = inlined_call_operand.hbm [shape: bf16[32,128], index: 7, kind: input, shape index: {}]
  %s8 = inlined_call_operand.hbm [shape: f32[1,128], index: 8, kind: input, shape index: {}]
  %s9 = inlined_call_operand.vmem [shape: bf16[128,128], index: 9, kind: input, shape index: {}]
  %s10 = inlined_call_operand.vmem [shape: f32[1,128], index: 10, kind: input, shape index: {}]
  %s11 = inlined_call_operand.hbm [shape: bf16[128,128], index: 11, kind: input, shape index: {}]
  %s12 = inlined_call_operand.vmem [shape: f32[1,128], index: 12, kind: input, shape index: {}]
  %s13 = inlined_call_operand.hbm [shape: bf16[128,128], index: 13, kind: input, shape index: {}]
  %s14 = inlined_call_operand.vmem [shape: f32[1,128], index: 14, kind: input, shape index: {}]
  %s15 = inlined_call_operand.hbm [shape: f32[16,128], index: 15, kind: output, shape index: {}]
  %s16 = sld [smem:[#allocation0]]
  $region106: #{tpu_custom_call.1} parent=0
    _
  %s18 = ssub.s32 1, %s16
  %s19 = scalar_select 0, %s18, %s16
  $region1: #{tpu_custom_call.1} parent=0
    #allocation3 [shape = 'u8[4096]{0}', space=vmem, size = 0x1000, scoped, tag = 'input window, operand 1, single buffered']
    #allocation4 [shape = 's32[1]{0}', space=sflag, size = 0x4, scoped, tag = 'scoped memory for tpu_custom_call.1']
    #allocation5 [shape = 's32[1]{0}', space=sflag, size = 0x4, scoped, tag = 'scoped memory for tpu_custom_call.1']
    #allocation6 [shape = 'u8[512]{0}', space=vmem, size = 0x400, scoped, tag = 'input window, operand 3, single buffered']
    #allocation7 [shape = 's32[1]{0}', space=sflag, size = 0x4, scoped, tag = 'scoped memory for tpu_custom_call.1']
    #allocation8 [shape = 'u8[8192]{0}', space=vmem, size = 0x2000, scoped, tag = 'input window, operand 4, single buffered']
    #allocation9 [shape = 'u8[8192]{0}', space=vmem, size = 0x2000, scoped, tag = 'input window, operand 5, single buffered']
    #allocation10 [shape = 's32[1]{0}', space=sflag, size = 0x4, scoped, tag = 'scoped memory for tpu_custom_call.1']
    #allocation11 [shape = 'u8[512]{0}', space=vmem, size = 0x400, scoped, tag = 'input window, operand 6, single buffered']
    #allocation12 [shape = 'u8[8192]{0}', space=vmem, size = 0x2000, scoped, tag = 'input window, operand 7, single buffered']
    #allocation13 [shape = 's32[1]{0}', space=sflag, size = 0x4, scoped, tag = 'scoped memory for tpu_custom_call.1']
    #allocation14 [shape = 'u8[512]{0}', space=vmem, size = 0x400, scoped, tag = 'input window, operand 8, single buffered']
    #allocation15 [shape = 'u8[32768]{0}', space=vmem, size = 0x8000, scoped, tag = 'input window, operand 11, single buffered']
    #allocation16 [shape = 's32[1]{0}', space=sflag, size = 0x4, scoped, tag = 'scoped memory for tpu_custom_call.1']
    #allocation17 [shape = 'u8[32768]{0}', space=vmem, size = 0x8000, scoped, tag = 'input window, operand 13, single buffered']
    #allocation18 [shape = 'u8[8192]{0}', space=vmem, size = 0x2000, scoped, tag = 'output window, operand 0, single buffered']
    %20 = vsyncpa [#allocation4], 0
    %21 = vsyncpa [#allocation7], 0
    %22 = vsyncpa [#allocation10], 0
    %23 = vsyncpa [#allocation13], 0
    %24 = vsyncpa [#allocation16], 0
    %25 = vsyncpa [#allocation5], 0
    // Predicated region
    $region2: #{tpu_custom_call.1} parent=1 // pred_check
      _
    $region3: #{tpu_custom_call.1} parent=1 // pred_check_branch
      %27 = sbr.rel (0) target = $region5
    $region4: #{tpu_custom_call.1} parent=1 // pred_region
      _
    $region5: #{tpu_custom_call.1} parent=1 // pred_fallthru
      _
    // Predicated region
    $region6: #{tpu_custom_call.1} parent=1 // pred_check
      _
    $region7: #{tpu_custom_call.1} parent=1 // pred_check_branch
      %29 = sbr.rel (0) target = $region9
    $region8: #{tpu_custom_call.1} parent=1 // pred_region
      %31 = vsyncadd [#allocation4], 0
      %s32 = sshll.u32 %s1, 4
      %s33 = int_to_ptr.hbm [resolvable:$true] %s32
      %s34 = sshll.u32 [#allocation3], 4
      %s35 = int_to_ptr.vmem [resolvable:$true] %s34
      %40 = dma.hbm_to_vmem [thread:$0]  %s33, 128, %s35, [#allocation4], 64, 64, 4
    $region9: #{tpu_custom_call.1} parent=1 // pred_fallthru
      _
    // Predicated region
    $region10: #{tpu_custom_call.1} parent=1 // pred_check
      _
    $region11: #{tpu_custom_call.1} parent=1 // pred_check_branch
      %42 = sbr.rel (0) target = $region13
    $region12: #{tpu_custom_call.1} parent=1 // pred_region
      _
    $region13: #{tpu_custom_call.1} parent=1 // pred_fallthru
      _
    // Predicated region
    $region14: #{tpu_custom_call.1} parent=1 // pred_check
      _
    $region15: #{tpu_custom_call.1} parent=1 // pred_check_branch
      %44 = sbr.rel (0) target = $region17
    $region16: #{tpu_custom_call.1} parent=1 // pred_region
      %46 = vsyncadd [#allocation7], 0
      %s48 = sshll.u32 %s3, 4
      %s49 = int_to_ptr.hbm [resolvable:$true] %s48
      %s50 = sshll.u32 [#allocation6], 4
      %s51 = int_to_ptr.vmem [resolvable:$true] %s50
      %53 = dma.hbm_to_vmem [thread:$0]  %s49, 16, %s51, [#allocation7]
    $region17: #{tpu_custom_call.1} parent=1 // pred_fallthru
      _
    // Predicated region
    $region18: #{tpu_custom_call.1} parent=1 // pred_check
      _
    $region19: #{tpu_custom_call.1} parent=1 // pred_check_branch
      %55 = sbr.rel (0) target = $region21
    $region20: #{tpu_custom_call.1} parent=1 // pred_region
      %57 = vsyncadd [#allocation7], 0
      %s58 = sshll.u32 %s4, 4
      %s59 = int_to_ptr.hbm [resolvable:$true] %s58
      %s60 = sshll.u32 [#allocation8], 4
      %s61 = int_to_ptr.vmem [resolvable:$true] %s60
      %66 = dma.hbm_to_vmem [thread:$0]  %s59, 256, %s61, [#allocation7], 64, 64, 4
    $region21: #{tpu_custom_call.1} parent=1 // pred_fallthru
      _
    // Predicated region
    $region22: #{tpu_custom_call.1} parent=1 // pred_check
      _
    $region23: #{tpu_custom_call.1} parent=1 // pred_check_branch
      %68 = sbr.rel (0) target = $region25
    $region24: #{tpu_custom_call.1} parent=1 // pred_region
      %70 = vsyncadd [#allocation10], 0
      %s71 = sshll.u32 %s5, 4
      %s72 = int_to_ptr.hbm [resolvable:$true] %s71
      %s73 = sshll.u32 [#allocation9], 4
      %s74 = int_to_ptr.vmem [resolvable:$true] %s73
      %79 = dma.hbm_to_vmem [thread:$0]  %s72, 256, %s74, [#allocation10], 64, 64, 4
    $region25: #{tpu_custom_call.1} parent=1 // pred_fallthru
      _
    // Predicated region
    $region26: #{tpu_custom_call.1} parent=1 // pred_check
      _
    $region27: #{tpu_custom_call.1} parent=1 // pred_check_branch
      %81 = sbr.rel (0) target = $region29
    $region28: #{tpu_custom_call.1} parent=1 // pred_region
      %83 = vsyncadd [#allocation10], 0
      %s85 = sshll.u32 %s6, 4
      %s86 = int_to_ptr.hbm [resolvable:$true] %s85
      %s87 = sshll.u32 [#allocation11], 4
      %s88 = int_to_ptr.vmem [resolvable:$true] %s87
      %90 = dma.hbm_to_vmem [thread:$0]  %s86, 16, %s88, [#allocation10]
    $region29: #{tpu_custom_call.1} parent=1 // pred_fallthru
      _
    // Predicated region
    $region30: #{tpu_custom_call.1} parent=1 // pred_check
      _
    $region31: #{tpu_custom_call.1} parent=1 // pred_check_branch
      %92 = sbr.rel (0) target = $region33
    $region32: #{tpu_custom_call.1} parent=1 // pred_region
      %94 = vsyncadd [#allocation13], 0
      %s95 = sshll.u32 %s7, 4
      %s96 = int_to_ptr.hbm [resolvable:$true] %s95
      %s97 = sshll.u32 [#allocation12], 4
      %s98 = int_to_ptr.vmem [resolvable:$true] %s97
      %103 = dma.hbm_to_vmem [thread:$0]  %s96, 256, %s98, [#allocation13], 64, 64, 4
    $region33: #{tpu_custom_call.1} parent=1 // pred_fallthru
      _
    // Predicated region
    $region34: #{tpu_custom_call.1} parent=1 // pred_check
      _
    $region35: #{tpu_custom_call.1} parent=1 // pred_check_branch
      %105 = sbr.rel (0) target = $region37
    $region36: #{tpu_custom_call.1} parent=1 // pred_region
      %107 = vsyncadd [#allocation13], 0
      %s109 = sshll.u32 %s8, 4
      %s110 = int_to_ptr.hbm [resolvable:$true] %s109
      %s111 = sshll.u32 [#allocation14], 4
      %s112 = int_to_ptr.vmem [resolvable:$true] %s111
      %114 = dma.hbm_to_vmem [thread:$0]  %s110, 16, %s112, [#allocation13]
    $region37: #{tpu_custom_call.1} parent=1 // pred_fallthru
      _
    // Predicated region
    $region38: #{tpu_custom_call.1} parent=1 // pred_check
      _
    $region39: #{tpu_custom_call.1} parent=1 // pred_check_branch
      %116 = sbr.rel (0) target = $region41
    $region40: #{tpu_custom_call.1} parent=1 // pred_region
      _
    $region41: #{tpu_custom_call.1} parent=1 // pred_fallthru
      _
    // Predicated region
    $region42: #{tpu_custom_call.1} parent=1 // pred_check
      _
    $region43: #{tpu_custom_call.1} parent=1 // pred_check_branch
      %118 = sbr.rel (0) target = $region45
    $region44: #{tpu_custom_call.1} parent=1 // pred_region
      _
    $region45: #{tpu_custom_call.1} parent=1 // pred_fallthru
      _
    // Predicated region
    $region46: #{tpu_custom_call.1} parent=1 // pred_check
      _
    $region47: #{tpu_custom_call.1} parent=1 // pred_check_branch
      %120 = sbr.rel (0) target = $region49
    $region48: #{tpu_custom_call.1} parent=1 // pred_region
      %122 = vsyncadd [#allocation16], 0
      %s123 = sshll.u32 %s11, 4
      %s124 = int_to_ptr.hbm [resolvable:$true] %s123
      %s125 = sshll.u32 [#allocation15], 4
      %s126 = int_to_ptr.vmem [resolvable:$true] %s125
      %131 = dma.hbm_to_vmem [thread:$0]  %s124, 1024, %s126, [#allocation16], 64, 64, 4
    $region49: #{tpu_custom_call.1} parent=1 // pred_fallthru
      _
    // Predicated region
    $region50: #{tpu_custom_call.1} parent=1 // pred_check
      _
    $region51: #{tpu_custom_call.1} parent=1 // pred_check_branch
      %133 = sbr.rel (0) target = $region53
    $region52: #{tpu_custom_call.1} parent=1 // pred_region
      _
    $region53: #{tpu_custom_call.1} parent=1 // pred_fallthru
      _
    // Predicated region
    $region54: #{tpu_custom_call.1} parent=1 // pred_check
      _
    $region55: #{tpu_custom_call.1} parent=1 // pred_check_branch
      %135 = sbr.rel (0) target = $region57
    $region56: #{tpu_custom_call.1} parent=1 // pred_region
      %137 = vsyncadd [#allocation16], 0
      %s138 = sshll.u32 %s13, 4
      %s139 = int_to_ptr.hbm [resolvable:$true] %s138
      %s140 = sshll.u32 [#allocation17], 4
      %s141 = int_to_ptr.vmem [resolvable:$true] %s140
      %146 = dma.hbm_to_vmem [thread:$0]  %s139, 1024, %s141, [#allocation16], 64, 64, 4
    $region57: #{tpu_custom_call.1} parent=1 // pred_fallthru
      _
    // Predicated region
    $region58: #{tpu_custom_call.1} parent=1 // pred_check
      _
    $region59: #{tpu_custom_call.1} parent=1 // pred_check_branch
      %148 = sbr.rel (0) target = $region61
    $region60: #{tpu_custom_call.1} parent=1 // pred_region
      _
    $region61: #{tpu_custom_call.1} parent=1 // pred_fallthru
      _
    // Predicated region
    $region62: #{tpu_custom_call.1} parent=1 // pred_check
      _
    $region63: #{tpu_custom_call.1} parent=1 // pred_check_branch
      %150 = sbr.rel (0) target = $region65
    $region64: #{tpu_custom_call.1} parent=1 // pred_region
      %152 = dma.done [#allocation4], 128
    $region65: #{tpu_custom_call.1} parent=1 // pred_fallthru
      _
    // Predicated region
    $region66: #{tpu_custom_call.1} parent=1 // pred_check
      _
    $region67: #{tpu_custom_call.1} parent=1 // pred_check_branch
      %154 = sbr.rel (0) target = $region69
    $region68: #{tpu_custom_call.1} parent=1 // pred_region
      %156 = dma.done [#allocation7], 16
    $region69: #{tpu_custom_call.1} parent=1 // pred_fallthru
      _
    // Predicated region
    $region70: #{tpu_custom_call.1} parent=1 // pred_check
      _
    $region71: #{tpu_custom_call.1} parent=1 // pred_check_branch
      %158 = sbr.rel (0) target = $region73
    $region72: #{tpu_custom_call.1} parent=1 // pred_region
      %160 = dma.done [#allocation7], 256
    $region73: #{tpu_custom_call.1} parent=1 // pred_fallthru
      _
    // Predicated region
    $region74: #{tpu_custom_call.1} parent=1 // pred_check
      _
    $region75: #{tpu_custom_call.1} parent=1 // pred_check_branch
      %162 = sbr.rel (0) target = $region77
    $region76: #{tpu_custom_call.1} parent=1 // pred_region
      %164 = dma.done [#allocation10], 256
    $region77: #{tpu_custom_call.1} parent=1 // pred_fallthru
      _
    // Predicated region
    $region78: #{tpu_custom_call.1} parent=1 // pred_check
      _
    $region79: #{tpu_custom_call.1} parent=1 // pred_check_branch
      %166 = sbr.rel (0) target = $region81
    $region80: #{tpu_custom_call.1} parent=1 // pred_region
      %168 = dma.done [#allocation10], 16
    $region81: #{tpu_custom_call.1} parent=1 // pred_fallthru
      _
    // Predicated region
    $region82: #{tpu_custom_call.1} parent=1 // pred_check
      _
    $region83: #{tpu_custom_call.1} parent=1 // pred_check_branch
      %170 = sbr.rel (0) target = $region85
    $region84: #{tpu_custom_call.1} parent=1 // pred_region
      %172 = dma.done [#allocation13], 256
    $region85: #{tpu_custom_call.1} parent=1 // pred_fallthru
      _
    // Predicated region
    $region86: #{tpu_custom_call.1} parent=1 // pred_check
      _
    $region87: #{tpu_custom_call.1} parent=1 // pred_check_branch
      %174 = sbr.rel (0) target = $region89
    $region88: #{tpu_custom_call.1} parent=1 // pred_region
      %176 = dma.done [#allocation13], 16
    $region89: #{tpu_custom_call.1} parent=1 // pred_fallthru
      _
    // Predicated region
    $region90: #{tpu_custom_call.1} parent=1 // pred_check
      _
    $region91: #{tpu_custom_call.1} parent=1 // pred_check_branch
      %178 = sbr.rel (0) target = $region93
    $region92: #{tpu_custom_call.1} parent=1 // pred_region
      %180 = dma.done [#allocation16], 1024
    $region93: #{tpu_custom_call.1} parent=1 // pred_fallthru
      _
    // Predicated region
    $region94: #{tpu_custom_call.1} parent=1 // pred_check
      _
    $region95: #{tpu_custom_call.1} parent=1 // pred_check_branch
      %182 = sbr.rel (0) target = $region97
    $region96: #{tpu_custom_call.1} parent=1 // pred_region
      %184 = dma.done [#allocation16], 1024
    $region97: #{tpu_custom_call.1} parent=1 // pred_fallthru
      _
    %v186 = vld [vmem:[%s0] sm:$0xf]
    %v187 = vld [vmem:[%s0 + $0x4] sm:$0xf]
    %v188 = vld [vmem:[%s0 + $0x8] sm:$0xf]
    %v189 = vld [vmem:[%s0 + $0xc] sm:$0xf]
    %v190 = vld [vmem:[%s0 + $0x10] sm:$0xf]
    %v191 = vld [vmem:[%s0 + $0x14] sm:$0xf]
    %v192 = vld [vmem:[%s0 + $0x18] sm:$0xf]
    %v193 = vld [vmem:[%s0 + $0x1c] sm:$0xf]
    %v194 = vld [vmem:[%s0 + $0x20] sm:$0xf]
    %v195 = vld [vmem:[%s0 + $0x24] sm:$0xf]
    %v196 = vld [vmem:[%s0 + $0x28] sm:$0xf]
    %v197 = vld [vmem:[%s0 + $0x2c] sm:$0xf]
    %v198 = vld [vmem:[%s0 + $0x30] sm:$0xf]
    %v199 = vld [vmem:[%s0 + $0x34] sm:$0xf]
    %v200 = vld [vmem:[%s0 + $0x38] sm:$0xf]
    %v201 = vld [vmem:[%s0 + $0x3c] sm:$0xf]
    %v202 = vld [vmem:[#allocation3] sm:$0xf]
    %v203 = vld [vmem:[#allocation3 + $0x4] sm:$0xf]
    %v204 = vld [vmem:[#allocation6] sm:$0x1]
    %v206 = vperm.slane %v204, 0
    %v224 = vunpack.c.l.b16 %v186
    %v225 = vunpack.c.l.b16 %v187
    %v226 = vunpack.c.l.b16 %v188
    %v227 = vunpack.c.l.b16 %v189
    %v228 = vunpack.c.l.b16 %v190
    %v229 = vunpack.c.l.b16 %v191
    %v230 = vunpack.c.l.b16 %v192
    %v231 = vunpack.c.l.b16 %v193
    %v232 = vunpack.c.l.b16 %v194
    %v233 = vunpack.c.l.b16 %v195
    %v234 = vunpack.c.l.b16 %v196
    %v235 = vunpack.c.l.b16 %v197
    %v236 = vunpack.c.l.b16 %v198
    %v237 = vunpack.c.l.b16 %v199
    %v238 = vunpack.c.l.b16 %v200
    %v239 = vunpack.c.l.b16 %v201
    %v240 = vpack.c.b16 %v225, %v224
    %v241 = vpack.c.b16 %v227, %v226
    %v242 = vpack.c.b16 %v229, %v228
    %v243 = vpack.c.b16 %v231, %v230
    %v244 = vpack.c.b16 %v233, %v232
    %v245 = vpack.c.b16 %v235, %v234
    %v246 = vpack.c.b16 %v237, %v236
    %v247 = vpack.c.b16 %v239, %v238
    %v250 = vunpack.c.l.b16 %v202
    %v251 = vunpack.c.l.b16 %v203
    %v252 = vpack.c.b16 %v251, %v250
    %vm254 = vcmask 130048
    %v256 = vsel %vm254, %v240, 0
    %v259 = vsel %vm254, %v241, 0
    %v262 = vsel %vm254, %v242, 0
    %v265 = vsel %vm254, %v243, 0
    %v268 = vsel %vm254, %v244, 0
    %v271 = vsel %vm254, %v245, 0
    %v274 = vsel %vm254, %v246, 0
    %v277 = vsel %vm254, %v247, 0
    %279 = vmatpush.bf16.msra.mxu0 0
    %280 = vmatpush.bf16.msra.mxu0 0
    %281 = vmatpush.bf16.msra.mxu0 0
    %282 = vmatpush.bf16.msra.mxu0 0
    %283 = vmatpush.bf16.msra.mxu0 0
    %284 = vmatpush.bf16.msra.mxu0 0
    %285 = vmatpush.bf16.msra.mxu0 0
    %286 = vmatpush.bf16.msra.mxu0 %v252
    %287 = vmatmul.bf16.gmra.mxu0 %v256
    %v288 = vpop.f32.mrf.mxu0
    %v289 = vadd.f32 %v206, %v288
    %v290 = vpop.f32.mrf.mxu0
    %v291 = vadd.f32 %v206, %v290
    %292 = vmatmul.bf16.gmra.mxu0 %v259
    %v293 = vpop.f32.mrf.mxu0
    %v294 = vadd.f32 %v206, %v293
    %v295 = vpop.f32.mrf.mxu0
    %v296 = vadd.f32 %v206, %v295
    %297 = vmatmul.bf16.gmra.mxu0 %v262
    %v298 = vpop.f32.mrf.mxu0
    %v299 = vadd.f32 %v206, %v298
    %v300 = vpop.f32.mrf.mxu0
    %v301 = vadd.f32 %v206, %v300
    %302 = vmatmul.bf16.gmra.mxu0 %v265
    %v303 = vpop.f32.mrf.mxu0
    %v304 = vadd.f32 %v206, %v303
    %v305 = vpop.f32.mrf.mxu0
    %v306 = vadd.f32 %v206, %v305
    %307 = vmatmul.bf16.gmra.mxu0 %v268
    %v308 = vpop.f32.mrf.mxu0
    %v309 = vadd.f32 %v206, %v308
    %v310 = vpop.f32.mrf.mxu0
    %v311 = vadd.f32 %v206, %v310
    %312 = vmatmul.bf16.gmra.mxu0 %v271
    %v313 = vpop.f32.mrf.mxu0
    %v314 = vadd.f32 %v206, %v313
    %v315 = vpop.f32.mrf.mxu0
    %v316 = vadd.f32 %v206, %v315
    %317 = vmatmul.bf16.gmra.mxu0 %v274
    %v318 = vpop.f32.mrf.mxu0
    %v319 = vadd.f32 %v206, %v318
    %v320 = vpop.f32.mrf.mxu0
    %v321 = vadd.f32 %v206, %v320
    %322 = vmatmul.bf16.gmra.mxu0 %v277
    %v323 = vpop.f32.mrf.mxu0
    %v324 = vadd.f32 %v206, %v323
    %v325 = vpop.f32.mrf.mxu0
    %v326 = vadd.f32 %v206, %v325
    %327 = vdwg.mxu0
    %328 = vst [vmem:[#allocation2] sm:$0xff] %v289
    %329 = vst [vmem:[#allocation2 + $0x8] sm:$0xff] %v291
    %330 = vst [vmem:[#allocation2 + $0x10] sm:$0xff] %v294
    %331 = vst [vmem:[#allocation2 + $0x18] sm:$0xff] %v296
    %332 = vst [vmem:[#allocation2 + $0x20] sm:$0xff] %v299
    %333 = vst [vmem:[#allocation2 + $0x28] sm:$0xff] %v301
    %334 = vst [vmem:[#allocation2 + $0x30] sm:$0xff] %v304
    %335 = vst [vmem:[#allocation2 + $0x38] sm:$0xff] %v306
    %336 = vst [vmem:[#allocation2 + $0x40] sm:$0xff] %v309
    %337 = vst [vmem:[#allocation2 + $0x48] sm:$0xff] %v311
    %338 = vst [vmem:[#allocation2 + $0x50] sm:$0xff] %v314
    %339 = vst [vmem:[#allocation2 + $0x58] sm:$0xff] %v316
    %340 = vst [vmem:[#allocation2 + $0x60] sm:$0xff] %v319
    %341 = vst [vmem:[#allocation2 + $0x68] sm:$0xff] %v321
    %342 = vst [vmem:[#allocation2 + $0x70] sm:$0xff] %v324
    %343 = vst [vmem:[#allocation2 + $0x78] sm:$0xff] %v326
    %v344 = vld [vmem:[%s2] sm:$0xf]
    %v345 = vld [vmem:[%s2 + $0x4] sm:$0xf]
    %v346 = vld [vmem:[%s2 + $0x8] sm:$0xf]
    %v347 = vld [vmem:[%s2 + $0xc] sm:$0xf]
    %v348 = vld [vmem:[#allocation8] sm:$0xf]
    %v349 = vld [vmem:[#allocation8 + $0x4] sm:$0xf]
    %v350 = vld [vmem:[#allocation8 + $0x8] sm:$0xf]
    %v351 = vld [vmem:[#allocation8 + $0xc] sm:$0xf]
    %v352 = vld [vmem:[#allocation9] sm:$0xf]
    %v353 = vld [vmem:[#allocation9 + $0x4] sm:$0xf]
    %v354 = vld [vmem:[#allocation9 + $0x8] sm:$0xf]
    %v355 = vld [vmem:[#allocation9 + $0xc] sm:$0xf]
    %v356 = vld [vmem:[#allocation11] sm:$0x1]
    %v358 = vperm.slane %v356, 0
    %v360 = vlaneseq
    %v361 = vand.u32 %v360, 127
    %vm362 = vcmp.ge.s32.totalorder %v361, 64
    %vm363 = vcmp.lt.s32.totalorder %v361, 96
    %vm364 = vmand %vm362, %vm363
    %v365 = vsel %vm364, 2.0, 1.0
    %v366 = vsel %vm364, -1.0, 0.0
    %v371 = vunpack.c.l.b16 %v352
    %v372 = vunpack.c.l.b16 %v353
    %v373 = vunpack.c.l.b16 %v354
    %v374 = vunpack.c.l.b16 %v355
    %v375 = vpack.c.b16 %v372, %v371
    %v376 = vpack.c.b16 %v374, %v373
    %vm379 = vcmask 261120
    %v381 = vsel %vm379, 0, 0
    %383 = vmatpush.bf16.msra.mxu0 0
    %384 = vmatpush.bf16.msra.mxu0 0
    %385 = vmatpush.bf16.msra.mxu0 0
    %386 = vmatpush.bf16.msra.mxu0 0
    %387 = vmatpush.bf16.msra.mxu0 0
    %388 = vmatpush.bf16.msra.mxu0 0
    %389 = vmatpush.bf16.msra.mxu0 %v376
    %390 = vmatpush.bf16.msra.mxu0 %v375
    %391 = vmatmul.bf16.gmra.mxu0 %v381
    %v392 = vpop.f32.mrf.mxu0
    %v393 = vadd.f32 0.0, %v392
    %v394 = vpop.f32.mrf.mxu0
    %v395 = vadd.f32 0.0, %v394
    %396 = vdwg.mxu0
    %v397 = vld [vmem:[#allocation2] sm:$0xff]
    %v398 = vld [vmem:[#allocation2 + $0x8] sm:$0xff]
    %v403 = vunpack.c.l.b16 %v344
    %v404 = vunpack.c.l.b16 %v345
    %v405 = vunpack.c.l.b16 %v346
    %v406 = vunpack.c.l.b16 %v347
    %v407 = vpack.c.b16 %v404, %v403
    %v408 = vpack.c.b16 %v406, %v405
    %411 = vmatpush.bf16.msra.mxu0 0
    %412 = vmatpush.bf16.msra.mxu0 0
    %413 = vmatpush.bf16.msra.mxu0 0
    %414 = vmatpush.bf16.msra.mxu0 0
    %415 = vmatpush.bf16.msra.mxu0 0
    %416 = vmatpush.bf16.msra.mxu0 0
    %417 = vmatpush.bf16.msra.mxu0 %v408
    %418 = vmatpush.bf16.msra.mxu0 %v407
    %419 = vmatmul.bf16.gmra.mxu0 %v381
    %v420 = vpop.f32.mrf.mxu0
    %v421 = vadd.f32 0.0, %v420
    %v422 = vpop.f32.mrf.mxu0
    %v423 = vadd.f32 0.0, %v422
    %424 = vdwg.mxu0
    %v425 = vadd.f32 %v397, %v421
    %v426 = vadd.f32 %v398, %v423
    %v427 = vxor.u32 %v425, 2147483648
    %v428 = vxor.u32 %v426, 2147483648
    %v429 = vmul.f32 %v427, 1.442695
    %v430 = vpow.pop %v429
    %v431 = vmul.f32 %v428, 1.442695
    %v432 = vpow.pop %v431
    %v433 = vadd.f32 %v430, 1.0
    %v434 = vadd.f32 %v432, 1.0
    %v435 = vrcp.pop %v433
    %v436 = vmul.f32 %v433, %v435
    %v437 = vsub.f32 1.0, %v436
    %v438 = vmul.f32 %v435, %v437
    %v439 = vadd.f32 %v435, %v438
    %vm440 = vweird.f32 %v433
    %vm441 = vweird.f32 %v435
    %vm442 = vmor %vm440, %vm441
    %v443 = vsel %vm442, %v435, %v439
    %v444 = vand.u32 2147483647, %v433
    %vm445 = vcmp.eq.f32.partialorder %v444, 8.507059e+37
    %v446 = vand.u32 %v433, 2147483648
    %v447 = vor.u32 1.1754944e-38, %v446
    %v448 = vsel %vm445, %v447, %v443
    %v449 = vmul.f32 1.0, %v448
    %v450 = vrcp.pop %v434
    %v451 = vmul.f32 %v434, %v450
    %v452 = vsub.f32 1.0, %v451
    %v453 = vmul.f32 %v450, %v452
    %v454 = vadd.f32 %v450, %v453
    %vm455 = vweird.f32 %v434
    %vm456 = vweird.f32 %v450
    %vm457 = vmor %vm455, %vm456
    %v458 = vsel %vm457, %v450, %v454
    %v459 = vand.u32 2147483647, %v434
    %vm460 = vcmp.eq.f32.partialorder %v459, 8.507059e+37
    %v461 = vand.u32 %v434, 2147483648
    %v462 = vor.u32 1.1754944e-38, %v461
    %v463 = vsel %vm460, %v462, %v458
    %v464 = vmul.f32 1.0, %v463
    %v465 = vmul.f32 %v449, %v365
    %v466 = vmul.f32 %v464, %v365
    %v467 = vadd.f32 %v465, %v366
    %v468 = vadd.f32 %v466, %v366
    %v469 = vmul.f32 %v467, 0.0
    %v470 = vmul.f32 %v468, 0.0
    %473 = vrot.lane.b32.xlu0 %v467, 64
    %v474 = vpop.permute.xlu0 %473
    %475 = vrot.lane.b32.xlu0 %v468, 64
    %v476 = vpop.permute.xlu0 %475
    %v479 = vmul.f32 %v467, %v474
    %v480 = vmul.f32 %v468, %v476
    %483 = vrot.lane.b32.xlu0 %v479, 32
    %v484 = vpop.permute.xlu0 %483
    %485 = vrot.lane.b32.xlu0 %v480, 32
    %v486 = vpop.permute.xlu0 %485
    %v489 = vadd.f32 %v469, %v484
    %v490 = vadd.f32 %v470, %v486
    %v491 = vtanh.pop %v489
    %v492 = vtanh.pop %v490
    %495 = vrot.lane.b32.xlu0 %v491, 64
    %v496 = vpop.permute.xlu0 %495
    %497 = vrot.lane.b32.xlu0 %v492, 64
    %v498 = vpop.permute.xlu0 %497
    %v501 = vmul.f32 %v467, %v496
    %v502 = vmul.f32 %v468, %v498
    %v503 = vpack.c.bf16 %v502, %v501
    %505 = vrot.lane.b32.xlu0 %v503, 32
    %v506 = vpop.permute.xlu0 %505
    %v511 = vunpack.c.l.b16 %v348
    %v512 = vunpack.c.l.b16 %v349
    %v513 = vunpack.c.l.b16 %v350
    %v514 = vunpack.c.l.b16 %v351
    %v515 = vpack.c.b16 %v512, %v511
    %v516 = vpack.c.b16 %v514, %v513
    %v520 = vsel %vm379, %v506, 0
    %522 = vmatpush.bf16.msra.mxu0 0
    %523 = vmatpush.bf16.msra.mxu0 0
    %524 = vmatpush.bf16.msra.mxu0 0
    %525 = vmatpush.bf16.msra.mxu0 0
    %526 = vmatpush.bf16.msra.mxu0 0
    %527 = vmatpush.bf16.msra.mxu0 0
    %528 = vmatpush.bf16.msra.mxu0 %v516
    %529 = vmatpush.bf16.msra.mxu0 %v515
    %530 = vmatmul.bf16.gmra.mxu0 %v520
    %v531 = vpop.f32.mrf.mxu0
    %v532 = vadd.f32 %v393, %v531
    %v533 = vpop.f32.mrf.mxu0
    %v534 = vadd.f32 %v395, %v533
    %535 = vdwg.mxu0
    %v536 = vadd.f32 %v532, %v358
    %v537 = vadd.f32 %v534, %v358
    %v538 = vxor.u32 %v536, 2147483648
    %v539 = vxor.u32 %v537, 2147483648
    %v540 = vmul.f32 %v538, 1.442695
    %v541 = vpow.pop %v540
    %v542 = vmul.f32 %v539, 1.442695
    %v543 = vpow.pop %v542
    %v544 = vadd.f32 %v541, 1.0
    %v545 = vadd.f32 %v543, 1.0
    %v546 = vrcp.pop %v544
    %v547 = vmul.f32 %v544, %v546
    %v548 = vsub.f32 1.0, %v547
    %v549 = vmul.f32 %v546, %v548
    %v550 = vadd.f32 %v546, %v549
    %vm551 = vweird.f32 %v544
    %vm552 = vweird.f32 %v546
    %vm553 = vmor %vm551, %vm552
    %v554 = vsel %vm553, %v546, %v550
    %v555 = vand.u32 2147483647, %v544
    %vm556 = vcmp.eq.f32.partialorder %v555, 8.507059e+37
    %v557 = vand.u32 %v544, 2147483648
    %v558 = vor.u32 1.1754944e-38, %v557
    %v559 = vsel %vm556, %v558, %v554
    %v560 = vmul.f32 1.0, %v559
    %v561 = vrcp.pop %v545
    %v562 = vmul.f32 %v545, %v561
    %v563 = vsub.f32 1.0, %v562
    %v564 = vmul.f32 %v561, %v563
    %v565 = vadd.f32 %v561, %v564
    %vm566 = vweird.f32 %v545
    %vm567 = vweird.f32 %v561
    %vm568 = vmor %vm566, %vm567
    %v569 = vsel %vm568, %v561, %v565
    %v570 = vand.u32 2147483647, %v545
    %vm571 = vcmp.eq.f32.partialorder %v570, 8.507059e+37
    %v572 = vand.u32 %v545, 2147483648
    %v573 = vor.u32 1.1754944e-38, %v572
    %v574 = vsel %vm571, %v573, %v569
    %v575 = vmul.f32 1.0, %v574
    %v576 = vmul.f32 %v560, %v365
    %v577 = vmul.f32 %v575, %v365
    %v578 = vadd.f32 %v576, %v366
    %v579 = vadd.f32 %v577, %v366
    %v580 = vmul.f32 %v578, 0.0
    %v581 = vmul.f32 %v579, 0.0
    %584 = vrot.lane.b32.xlu0 %v578, 64
    %v585 = vpop.permute.xlu0 %584
    %586 = vrot.lane.b32.xlu0 %v579, 64
    %v587 = vpop.permute.xlu0 %586
    %v590 = vmul.f32 %v578, %v585
    %v591 = vmul.f32 %v579, %v587
    %594 = vrot.lane.b32.xlu0 %v590, 32
    %v595 = vpop.permute.xlu0 %594
    %596 = vrot.lane.b32.xlu0 %v591, 32
    %v597 = vpop.permute.xlu0 %596
    %v600 = vadd.f32 %v580, %v595
    %v601 = vadd.f32 %v581, %v597
    %v602 = vtanh.pop %v600
    %v603 = vtanh.pop %v601
    %606 = vrot.lane.b32.xlu0 %v602, 64
    %v607 = vpop.permute.xlu0 %606
    %608 = vrot.lane.b32.xlu0 %v603, 64
    %v609 = vpop.permute.xlu0 %608
    %v612 = vmul.f32 %v578, %v607
    %v613 = vmul.f32 %v579, %v609
    %v614 = vpack.c.bf16 %v613, %v612
    %616 = vrot.lane.b32.xlu0 %v614, 32
    %v617 = vpop.permute.xlu0 %616
    %v619 = vsel %vm379, %v617, 0
    %621 = vmatpush.bf16.msra.mxu0 0
    %622 = vmatpush.bf16.msra.mxu0 0
    %623 = vmatpush.bf16.msra.mxu0 0
    %624 = vmatpush.bf16.msra.mxu0 0
    %625 = vmatpush.bf16.msra.mxu0 0
    %626 = vmatpush.bf16.msra.mxu0 0
    %627 = vmatpush.bf16.msra.mxu0 %v376
    %628 = vmatpush.bf16.msra.mxu0 %v375
    %629 = vmatmul.bf16.gmra.mxu0 %v619
    %v630 = vpop.f32.mrf.mxu0
    %v631 = vadd.f32 0.0, %v630
    %v632 = vpop.f32.mrf.mxu0
    %v633 = vadd.f32 0.0, %v632
    %634 = vdwg.mxu0
    %s635 = scalar_lea.vmem [#allocation2], 16
    %v636 = vld [vmem:[%s635] sm:$0xff]
    %v637 = vld [vmem:[%s635 + $0x8] sm:$0xff]
    %638 = vmatpush.bf16.msra.mxu0 0
    %639 = vmatpush.bf16.msra.mxu0 0
    %640 = vmatpush.bf16.msra.mxu0 0
    %641 = vmatpush.bf16.msra.mxu0 0
    %642 = vmatpush.bf16.msra.mxu0 0
    %643 = vmatpush.bf16.msra.mxu0 0
    %644 = vmatpush.bf16.msra.mxu0 %v408
    %645 = vmatpush.bf16.msra.mxu0 %v407
    %646 = vmatmul.bf16.gmra.mxu0 %v520
    %v647 = vpop.f32.mrf.mxu0
    %v648 = vadd.f32 0.0, %v647
    %v649 = vpop.f32.mrf.mxu0
    %v650 = vadd.f32 0.0, %v649
    %651 = vdwg.mxu0
    %v652 = vadd.f32 %v636, %v648
    %v653 = vadd.f32 %v637, %v650
    %v654 = vxor.u32 %v652, 2147483648
    %v655 = vxor.u32 %v653, 2147483648
    %v656 = vmul.f32 %v654, 1.442695
    %v657 = vpow.pop %v656
    %v658 = vmul.f32 %v655, 1.442695
    %v659 = vpow.pop %v658
    %v660 = vadd.f32 %v657, 1.0
    %v661 = vadd.f32 %v659, 1.0
    %v662 = vrcp.pop %v660
    %v663 = vmul.f32 %v660, %v662
    %v664 = vsub.f32 1.0, %v663
    %v665 = vmul.f32 %v662, %v664
    %v666 = vadd.f32 %v662, %v665
    %vm667 = vweird.f32 %v660
    %vm668 = vweird.f32 %v662
    %vm669 = vmor %vm667, %vm668
    %v670 = vsel %vm669, %v662, %v666
    %v671 = vand.u32 2147483647, %v660
    %vm672 = vcmp.eq.f32.partialorder %v671, 8.507059e+37
    %v673 = vand.u32 %v660, 2147483648
    %v674 = vor.u32 1.1754944e-38, %v673
    %v675 = vsel %vm672, %v674, %v670
    %v676 = vmul.f32 1.0, %v675
    %v677 = vrcp.pop %v661
    %v678 = vmul.f32 %v661, %v677
    %v679 = vsub.f32 1.0, %v678
    %v680 = vmul.f32 %v677, %v679
    %v681 = vadd.f32 %v677, %v680
    %vm682 = vweird.f32 %v661
    %vm683 = vweird.f32 %v677
    %vm684 = vmor %vm682, %vm683
    %v685 = vsel %vm684, %v677, %v681
    %v686 = vand.u32 2147483647, %v661
    %vm687 = vcmp.eq.f32.partialorder %v686, 8.507059e+37
    %v688 = vand.u32 %v661, 2147483648
    %v689 = vor.u32 1.1754944e-38, %v688
    %v690 = vsel %vm687, %v689, %v685
    %v691 = vmul.f32 1.0, %v690
    %v692 = vmul.f32 %v676, %v365
    %v693 = vmul.f32 %v691, %v365
    %v694 = vadd.f32 %v692, %v366
    %v695 = vadd.f32 %v693, %v366
    %v696 = vmul.f32 %v694, %v489
    %v697 = vmul.f32 %v695, %v490
    %700 = vrot.lane.b32.xlu0 %v694, 64
    %v701 = vpop.permute.xlu0 %700
    %702 = vrot.lane.b32.xlu0 %v695, 64
    %v703 = vpop.permute.xlu0 %702
    %v706 = vmul.f32 %v694, %v701
    %v707 = vmul.f32 %v695, %v703
    %710 = vrot.lane.b32.xlu0 %v706, 32
    %v711 = vpop.permute.xlu0 %710
    %712 = vrot.lane.b32.xlu0 %v707, 32
    %v713 = vpop.permute.xlu0 %712
    %v716 = vadd.f32 %v696, %v711
    %v717 = vadd.f32 %v697, %v713
    %v718 = vtanh.pop %v716
    %v719 = vtanh.pop %v717
    %722 = vrot.lane.b32.xlu0 %v718, 64
    %v723 = vpop.permute.xlu0 %722
    %724 = vrot.lane.b32.xlu0 %v719, 64
    %v725 = vpop.permute.xlu0 %724
    %v728 = vmul.f32 %v694, %v723
    %v729 = vmul.f32 %v695, %v725
    %v730 = vpack.c.bf16 %v729, %v728
    %732 = vrot.lane.b32.xlu0 %v730, 32
    %v733 = vpop.permute.xlu0 %732
    %v735 = vsel %vm379, %v733, 0
    %737 = vmatpush.bf16.msra.mxu0 0
    %738 = vmatpush.bf16.msra.mxu0 0
    %739 = vmatpush.bf16.msra.mxu0 0
    %740 = vmatpush.bf16.msra.mxu0 0
    %741 = vmatpush.bf16.msra.mxu0 0
    %742 = vmatpush.bf16.msra.mxu0 0
    %743 = vmatpush.bf16.msra.mxu0 %v516
    %744 = vmatpush.bf16.msra.mxu0 %v515
    %745 = vmatmul.bf16.gmra.mxu0 %v735
    %v746 = vpop.f32.mrf.mxu0
    %v747 = vadd.f32 %v631, %v746
    %v748 = vpop.f32.mrf.mxu0
    %v749 = vadd.f32 %v633, %v748
    %750 = vdwg.mxu0
    %v751 = vadd.f32 %v747, %v358
    %v752 = vadd.f32 %v749, %v358
    %v753 = vxor.u32 %v751, 2147483648
    %v754 = vxor.u32 %v752, 2147483648
    %v755 = vmul.f32 %v753, 1.442695
    %v756 = vpow.pop %v755
    %v757 = vmul.f32 %v754, 1.442695
    %v758 = vpow.pop %v757
    %v759 = vadd.f32 %v756, 1.0
    %v760 = vadd.f32 %v758, 1.0
    %v761 = vrcp.pop %v759
    %v762 = vmul.f32 %v759, %v761
    %v763 = vsub.f32 1.0, %v762
    %v764 = vmul.f32 %v761, %v763
    %v765 = vadd.f32 %v761, %v764
    %vm766 = vweird.f32 %v759
    %vm767 = vweird.f32 %v761
    %vm768 = vmor %vm766, %vm767
    %v769 = vsel %vm768, %v761, %v765
    %v770 = vand.u32 2147483647, %v759
    %vm771 = vcmp.eq.f32.partialorder %v770, 8.507059e+37
    %v772 = vand.u32 %v759, 2147483648
    %v773 = vor.u32 1.1754944e-38, %v772
    %v774 = vsel %vm771, %v773, %v769
    %v775 = vmul.f32 1.0, %v774
    %v776 = vrcp.pop %v760
    %v777 = vmul.f32 %v760, %v776
    %v778 = vsub.f32 1.0, %v777
    %v779 = vmul.f32 %v776, %v778
    %v780 = vadd.f32 %v776, %v779
    %vm781 = vweird.f32 %v760
    %vm782 = vweird.f32 %v776
    %vm783 = vmor %vm781, %vm782
    %v784 = vsel %vm783, %v776, %v780
    %v785 = vand.u32 2147483647, %v760
    %vm786 = vcmp.eq.f32.partialorder %v785, 8.507059e+37
    %v787 = vand.u32 %v760, 2147483648
    %v788 = vor.u32 1.1754944e-38, %v787
    %v789 = vsel %vm786, %v788, %v784
    %v790 = vmul.f32 1.0, %v789
    %v791 = vmul.f32 %v775, %v365
    %v792 = vmul.f32 %v790, %v365
    %v793 = vadd.f32 %v791, %v366
    %v794 = vadd.f32 %v792, %v366
    %v795 = vmul.f32 %v793, %v600
    %v796 = vmul.f32 %v794, %v601
    %799 = vrot.lane.b32.xlu0 %v793, 64
    %v800 = vpop.permute.xlu0 %799
    %801 = vrot.lane.b32.xlu0 %v794, 64
    %v802 = vpop.permute.xlu0 %801
    %v805 = vmul.f32 %v793, %v800
    %v806 = vmul.f32 %v794, %v802
    %809 = vrot.lane.b32.xlu0 %v805, 32
    %v810 = vpop.permute.xlu0 %809
    %811 = vrot.lane.b32.xlu0 %v806, 32
    %v812 = vpop.permute.xlu0 %811
    %v815 = vadd.f32 %v795, %v810
    %v816 = vadd.f32 %v796, %v812
    %v817 = vtanh.pop %v815
    %v818 = vtanh.pop %v816
    %821 = vrot.lane.b32.xlu0 %v817, 64
    %v822 = vpop.permute.xlu0 %821
    %823 = vrot.lane.b32.xlu0 %v818, 64
    %v824 = vpop.permute.xlu0 %823
    %v827 = vmul.f32 %v793, %v822
    %v828 = vmul.f32 %v794, %v824
    %v829 = vpack.c.bf16 %v828, %v827
    %831 = vrot.lane.b32.xlu0 %v829, 32
    %v832 = vpop.permute.xlu0 %831
    %v834 = vsel %vm379, %v832, 0
    %836 = vmatpush.bf16.msra.mxu0 0
    %837 = vmatpush.bf16.msra.mxu0 0
    %838 = vmatpush.bf16.msra.mxu0 0
    %839 = vmatpush.bf16.msra.mxu0 0
    %840 = vmatpush.bf16.msra.mxu0 0
    %841 = vmatpush.bf16.msra.mxu0 0
    %842 = vmatpush.bf16.msra.mxu0 %v376
    %843 = vmatpush.bf16.msra.mxu0 %v375
    %844 = vmatmul.bf16.gmra.mxu0 %v834
    %v845 = vpop.f32.mrf.mxu0
    %v846 = vadd.f32 0.0, %v845
    %v847 = vpop.f32.mrf.mxu0
    %v848 = vadd.f32 0.0, %v847
    %849 = vdwg.mxu0
    %s850 = scalar_lea.vmem [#allocation2], 32
    %v851 = vld [vmem:[%s850] sm:$0xff]
    %v852 = vld [vmem:[%s850 + $0x8] sm:$0xff]
    %853 = vmatpush.bf16.msra.mxu0 0
    %854 = vmatpush.bf16.msra.mxu0 0
    %855 = vmatpush.bf16.msra.mxu0 0
    %856 = vmatpush.bf16.msra.mxu0 0
    %857 = vmatpush.bf16.msra.mxu0 0
    %858 = vmatpush.bf16.msra.mxu0 0
    %859 = vmatpush.bf16.msra.mxu0 %v408
    %860 = vmatpush.bf16.msra.mxu0 %v407
    %861 = vmatmul.bf16.gmra.mxu0 %v735
    %v862 = vpop.f32.mrf.mxu0
    %v863 = vadd.f32 0.0, %v862
    %v864 = vpop.f32.mrf.mxu0
    %v865 = vadd.f32 0.0, %v864
    %866 = vdwg.mxu0
    %v867 = vadd.f32 %v851, %v863
    %v868 = vadd.f32 %v852, %v865
    %v869 = vxor.u32 %v867, 2147483648
    %v870 = vxor.u32 %v868, 2147483648
    %v871 = vmul.f32 %v869, 1.442695
    %v872 = vpow.pop %v871
    %v873 = vmul.f32 %v870, 1.442695
    %v874 = vpow.pop %v873
    %v875 = vadd.f32 %v872, 1.0
    %v876 = vadd.f32 %v874, 1.0
    %v877 = vrcp.pop %v875
    %v878 = vmul.f32 %v875, %v877
    %v879 = vsub.f32 1.0, %v878
    %v880 = vmul.f32 %v877, %v879
    %v881 = vadd.f32 %v877, %v880
    %vm882 = vweird.f32 %v875
    %vm883 = vweird.f32 %v877
    %vm884 = vmor %vm882, %vm883
    %v885 = vsel %vm884, %v877, %v881
    %v886 = vand.u32 2147483647, %v875
    %vm887 = vcmp.eq.f32.partialorder %v886, 8.507059e+37
    %v888 = vand.u32 %v875, 2147483648
    %v889 = vor.u32 1.1754944e-38, %v888
    %v890 = vsel %vm887, %v889, %v885
    %v891 = vmul.f32 1.0, %v890
    %v892 = vrcp.pop %v876
    %v893 = vmul.f32 %v876, %v892
    %v894 = vsub.f32 1.0, %v893
    %v895 = vmul.f32 %v892, %v894
    %v896 = vadd.f32 %v892, %v895
    %vm897 = vweird.f32 %v876
    %vm898 = vweird.f32 %v892
    %vm899 = vmor %vm897, %vm898
    %v900 = vsel %vm899, %v892, %v896
    %v901 = vand.u32 2147483647, %v876
    %vm902 = vcmp.eq.f32.partialorder %v901, 8.507059e+37
    %v903 = vand.u32 %v876, 2147483648
    %v904 = vor.u32 1.1754944e-38, %v903
    %v905 = vsel %vm902, %v904, %v900
    %v906 = vmul.f32 1.0, %v905
    %v907 = vmul.f32 %v891, %v365
    %v908 = vmul.f32 %v906, %v365
    %v909 = vadd.f32 %v907, %v366
    %v910 = vadd.f32 %v908, %v366
    %v911 = vmul.f32 %v909, %v716
    %v912 = vmul.f32 %v910, %v717
    %915 = vrot.lane.b32.xlu0 %v909, 64
    %v916 = vpop.permute.xlu0 %915
    %917 = vrot.lane.b32.xlu0 %v910, 64
    %v918 = vpop.permute.xlu0 %917
    %v921 = vmul.f32 %v909, %v916
    %v922 = vmul.f32 %v910, %v918
    %925 = vrot.lane.b32.xlu0 %v921, 32
    %v926 = vpop.permute.xlu0 %925
    %927 = vrot.lane.b32.xlu0 %v922, 32
    %v928 = vpop.permute.xlu0 %927
    %v931 = vadd.f32 %v911, %v926
    %v932 = vadd.f32 %v912, %v928
    %v933 = vtanh.pop %v931
    %v934 = vtanh.pop %v932
    %937 = vrot.lane.b32.xlu0 %v933, 64
    %v938 = vpop.permute.xlu0 %937
    %939 = vrot.lane.b32.xlu0 %v934, 64
    %v940 = vpop.permute.xlu0 %939
    %v943 = vmul.f32 %v909, %v938
    %v944 = vmul.f32 %v910, %v940
    %v945 = vpack.c.bf16 %v944, %v943
    %947 = vrot.lane.b32.xlu0 %v945, 32
    %v948 = vpop.permute.xlu0 %947
    %v950 = vsel %vm379, %v948, 0
    %952 = vmatpush.bf16.msra.mxu0 0
    %953 = vmatpush.bf16.msra.mxu0 0
    %954 = vmatpush.bf16.msra.mxu0 0
    %955 = vmatpush.bf16.msra.mxu0 0
    %956 = vmatpush.bf16.msra.mxu0 0
    %957 = vmatpush.bf16.msra.mxu0 0
    %958 = vmatpush.bf16.msra.mxu0 %v516
    %959 = vmatpush.bf16.msra.mxu0 %v515
    %960 = vmatmul.bf16.gmra.mxu0 %v950
    %v961 = vpop.f32.mrf.mxu0
    %v962 = vadd.f32 %v846, %v961
    %v963 = vpop.f32.mrf.mxu0
    %v964 = vadd.f32 %v848, %v963
    %965 = vdwg.mxu0
    %v966 = vadd.f32 %v962, %v358
    %v967 = vadd.f32 %v964, %v358
    %v968 = vxor.u32 %v966, 2147483648
    %v969 = vxor.u32 %v967, 2147483648
    %v970 = vmul.f32 %v968, 1.442695
    %v971 = vpow.pop %v970
    %v972 = vmul.f32 %v969, 1.442695
    %v973 = vpow.pop %v972
    %v974 = vadd.f32 %v971, 1.0
    %v975 = vadd.f32 %v973, 1.0
    %v976 = vrcp.pop %v974
    %v977 = vmul.f32 %v974, %v976
    %v978 = vsub.f32 1.0, %v977
    %v979 = vmul.f32 %v976, %v978
    %v980 = vadd.f32 %v976, %v979
    %vm981 = vweird.f32 %v974
    %vm982 = vweird.f32 %v976
    %vm983 = vmor %vm981, %vm982
    %v984 = vsel %vm983, %v976, %v980
    %v985 = vand.u32 2147483647, %v974
    %vm986 = vcmp.eq.f32.partialorder %v985, 8.507059e+37
    %v987 = vand.u32 %v974, 2147483648
    %v988 = vor.u32 1.1754944e-38, %v987
    %v989 = vsel %vm986, %v988, %v984
    %v990 = vmul.f32 1.0, %v989
    %v991 = vrcp.pop %v975
    %v992 = vmul.f32 %v975, %v991
    %v993 = vsub.f32 1.0, %v992
    %v994 = vmul.f32 %v991, %v993
    %v995 = vadd.f32 %v991, %v994
    %vm996 = vweird.f32 %v975
    %vm997 = vweird.f32 %v991
    %vm998 = vmor %vm996, %vm997
    %v999 = vsel %vm998, %v991, %v995
    %v1000 = vand.u32 2147483647, %v975
    %vm1001 = vcmp.eq.f32.partialorder %v1000, 8.507059e+37
    %v1002 = vand.u32 %v975, 2147483648
    %v1003 = vor.u32 1.1754944e-38, %v1002
    %v1004 = vsel %vm1001, %v1003, %v999
    %v1005 = vmul.f32 1.0, %v1004
    %v1006 = vmul.f32 %v990, %v365
    %v1007 = vmul.f32 %v1005, %v365
    %v1008 = vadd.f32 %v1006, %v366
    %v1009 = vadd.f32 %v1007, %v366
    %v1010 = vmul.f32 %v1008, %v815
    %v1011 = vmul.f32 %v1009, %v816
    %1014 = vrot.lane.b32.xlu0 %v1008, 64
    %v1015 = vpop.permute.xlu0 %1014
    %1016 = vrot.lane.b32.xlu0 %v1009, 64
    %v1017 = vpop.permute.xlu0 %1016
    %v1020 = vmul.f32 %v1008, %v1015
    %v1021 = vmul.f32 %v1009, %v1017
    %1024 = vrot.lane.b32.xlu0 %v1020, 32
    %v1025 = vpop.permute.xlu0 %1024
    %1026 = vrot.lane.b32.xlu0 %v1021, 32
    %v1027 = vpop.permute.xlu0 %1026
    %v1030 = vadd.f32 %v1010, %v1025
    %v1031 = vadd.f32 %v1011, %v1027
    %v1032 = vtanh.pop %v1030
    %v1033 = vtanh.pop %v1031
    %1036 = vrot.lane.b32.xlu0 %v1032, 64
    %v1037 = vpop.permute.xlu0 %1036
    %1038 = vrot.lane.b32.xlu0 %v1033, 64
    %v1039 = vpop.permute.xlu0 %1038
    %v1042 = vmul.f32 %v1008, %v1037
    %v1043 = vmul.f32 %v1009, %v1039
    %v1044 = vpack.c.bf16 %v1043, %v1042
    %1046 = vrot.lane.b32.xlu0 %v1044, 32
    %v1047 = vpop.permute.xlu0 %1046
    %v1049 = vsel %vm379, %v1047, 0
    %1051 = vmatpush.bf16.msra.mxu0 0
    %1052 = vmatpush.bf16.msra.mxu0 0
    %1053 = vmatpush.bf16.msra.mxu0 0
    %1054 = vmatpush.bf16.msra.mxu0 0
    %1055 = vmatpush.bf16.msra.mxu0 0
    %1056 = vmatpush.bf16.msra.mxu0 0
    %1057 = vmatpush.bf16.msra.mxu0 %v376
    %1058 = vmatpush.bf16.msra.mxu0 %v375
    %1059 = vmatmul.bf16.gmra.mxu0 %v1049
    %v1060 = vpop.f32.mrf.mxu0
    %v1061 = vadd.f32 0.0, %v1060
    %v1062 = vpop.f32.mrf.mxu0
    %v1063 = vadd.f32 0.0, %v1062
    %1064 = vdwg.mxu0
    %s1065 = scalar_lea.vmem [#allocation2], 48
    %v1066 = vld [vmem:[%s1065] sm:$0xff]
    %v1067 = vld [vmem:[%s1065 + $0x8] sm:$0xff]
    %1068 = vmatpush.bf16.msra.mxu0 0
    %1069 = vmatpush.bf16.msra.mxu0 0
    %1070 = vmatpush.bf16.msra.mxu0 0
    %1071 = vmatpush.bf16.msra.mxu0 0
    %1072 = vmatpush.bf16.msra.mxu0 0
    %1073 = vmatpush.bf16.msra.mxu0 0
    %1074 = vmatpush.bf16.msra.mxu0 %v408
    %1075 = vmatpush.bf16.msra.mxu0 %v407
    %1076 = vmatmul.bf16.gmra.mxu0 %v950
    %v1077 = vpop.f32.mrf.mxu0
    %v1078 = vadd.f32 0.0, %v1077
    %v1079 = vpop.f32.mrf.mxu0
    %v1080 = vadd.f32 0.0, %v1079
    %1081 = vdwg.mxu0
    %v1082 = vadd.f32 %v1066, %v1078
    %v1083 = vadd.f32 %v1067, %v1080
    %v1084 = vxor.u32 %v1082, 2147483648
    %v1085 = vxor.u32 %v1083, 2147483648
    %v1086 = vmul.f32 %v1084, 1.442695
    %v1087 = vpow.pop %v1086
    %v1088 = vmul.f32 %v1085, 1.442695
    %v1089 = vpow.pop %v1088
    %v1090 = vadd.f32 %v1087, 1.0
    %v1091 = vadd.f32 %v1089, 1.0
    %v1092 = vrcp.pop %v1090
    %v1093 = vmul.f32 %v1090, %v1092
    %v1094 = vsub.f32 1.0, %v1093
    %v1095 = vmul.f32 %v1092, %v1094
    %v1096 = vadd.f32 %v1092, %v1095
    %vm1097 = vweird.f32 %v1090
    %vm1098 = vweird.f32 %v1092
    %vm1099 = vmor %vm1097, %vm1098
    %v1100 = vsel %vm1099, %v1092, %v1096
    %v1101 = vand.u32 2147483647, %v1090
    %vm1102 = vcmp.eq.f32.partialorder %v1101, 8.507059e+37
    %v1103 = vand.u32 %v1090, 2147483648
    %v1104 = vor.u32 1.1754944e-38, %v1103
    %v1105 = vsel %vm1102, %v1104, %v1100
    %v1106 = vmul.f32 1.0, %v1105
    %v1107 = vrcp.pop %v1091
    %v1108 = vmul.f32 %v1091, %v1107
    %v1109 = vsub.f32 1.0, %v1108
    %v1110 = vmul.f32 %v1107, %v1109
    %v1111 = vadd.f32 %v1107, %v1110
    %vm1112 = vweird.f32 %v1091
    %vm1113 = vweird.f32 %v1107
    %vm1114 = vmor %vm1112, %vm1113
    %v1115 = vsel %vm1114, %v1107, %v1111
    %v1116 = vand.u32 2147483647, %v1091
    %vm1117 = vcmp.eq.f32.partialorder %v1116, 8.507059e+37
    %v1118 = vand.u32 %v1091, 2147483648
    %v1119 = vor.u32 1.1754944e-38, %v1118
    %v1120 = vsel %vm1117, %v1119, %v1115
    %v1121 = vmul.f32 1.0, %v1120
    %v1122 = vmul.f32 %v1106, %v365
    %v1123 = vmul.f32 %v1121, %v365
    %v1124 = vadd.f32 %v1122, %v366
    %v1125 = vadd.f32 %v1123, %v366
    %v1126 = vmul.f32 %v1124, %v931
    %v1127 = vmul.f32 %v1125, %v932
    %1130 = vrot.lane.b32.xlu0 %v1124, 64
    %v1131 = vpop.permute.xlu0 %1130
    %1132 = vrot.lane.b32.xlu0 %v1125, 64
    %v1133 = vpop.permute.xlu0 %1132
    %v1136 = vmul.f32 %v1124, %v1131
    %v1137 = vmul.f32 %v1125, %v1133
    %1140 = vrot.lane.b32.xlu0 %v1136, 32
    %v1141 = vpop.permute.xlu0 %1140
    %1142 = vrot.lane.b32.xlu0 %v1137, 32
    %v1143 = vpop.permute.xlu0 %1142
    %v1146 = vadd.f32 %v1126, %v1141
    %v1147 = vadd.f32 %v1127, %v1143
    %v1148 = vtanh.pop %v1146
    %v1149 = vtanh.pop %v1147
    %1152 = vrot.lane.b32.xlu0 %v1148, 64
    %v1153 = vpop.permute.xlu0 %1152
    %1154 = vrot.lane.b32.xlu0 %v1149, 64
    %v1155 = vpop.permute.xlu0 %1154
    %v1158 = vmul.f32 %v1124, %v1153
    %v1159 = vmul.f32 %v1125, %v1155
    %v1160 = vpack.c.bf16 %v1159, %v1158
    %1162 = vrot.lane.b32.xlu0 %v1160, 32
    %v1163 = vpop.permute.xlu0 %1162
    %v1165 = vsel %vm379, %v1163, 0
    %1167 = vmatpush.bf16.msra.mxu0 0
    %1168 = vmatpush.bf16.msra.mxu0 0
    %1169 = vmatpush.bf16.msra.mxu0 0
    %1170 = vmatpush.bf16.msra.mxu0 0
    %1171 = vmatpush.bf16.msra.mxu0 0
    %1172 = vmatpush.bf16.msra.mxu0 0
    %1173 = vmatpush.bf16.msra.mxu0 %v516
    %1174 = vmatpush.bf16.msra.mxu0 %v515
    %1175 = vmatmul.bf16.gmra.mxu0 %v1165
    %v1176 = vpop.f32.mrf.mxu0
    %v1177 = vadd.f32 %v1061, %v1176
    %v1178 = vpop.f32.mrf.mxu0
    %v1179 = vadd.f32 %v1063, %v1178
    %1180 = vdwg.mxu0
    %v1181 = vadd.f32 %v1177, %v358
    %v1182 = vadd.f32 %v1179, %v358
    %v1183 = vxor.u32 %v1181, 2147483648
    %v1184 = vxor.u32 %v1182, 2147483648
    %v1185 = vmul.f32 %v1183, 1.442695
    %v1186 = vpow.pop %v1185
    %v1187 = vmul.f32 %v1184, 1.442695
    %v1188 = vpow.pop %v1187
    %v1189 = vadd.f32 %v1186, 1.0
    %v1190 = vadd.f32 %v1188, 1.0
    %v1191 = vrcp.pop %v1189
    %v1192 = vmul.f32 %v1189, %v1191
    %v1193 = vsub.f32 1.0, %v1192
    %v1194 = vmul.f32 %v1191, %v1193
    %v1195 = vadd.f32 %v1191, %v1194
    %vm1196 = vweird.f32 %v1189
    %vm1197 = vweird.f32 %v1191
    %vm1198 = vmor %vm1196, %vm1197
    %v1199 = vsel %vm1198, %v1191, %v1195
    %v1200 = vand.u32 2147483647, %v1189
    %vm1201 = vcmp.eq.f32.partialorder %v1200, 8.507059e+37
    %v1202 = vand.u32 %v1189, 2147483648
    %v1203 = vor.u32 1.1754944e-38, %v1202
    %v1204 = vsel %vm1201, %v1203, %v1199
    %v1205 = vmul.f32 1.0, %v1204
    %v1206 = vrcp.pop %v1190
    %v1207 = vmul.f32 %v1190, %v1206
    %v1208 = vsub.f32 1.0, %v1207
    %v1209 = vmul.f32 %v1206, %v1208
    %v1210 = vadd.f32 %v1206, %v1209
    %vm1211 = vweird.f32 %v1190
    %vm1212 = vweird.f32 %v1206
    %vm1213 = vmor %vm1211, %vm1212
    %v1214 = vsel %vm1213, %v1206, %v1210
    %v1215 = vand.u32 2147483647, %v1190
    %vm1216 = vcmp.eq.f32.partialorder %v1215, 8.507059e+37
    %v1217 = vand.u32 %v1190, 2147483648
    %v1218 = vor.u32 1.1754944e-38, %v1217
    %v1219 = vsel %vm1216, %v1218, %v1214
    %v1220 = vmul.f32 1.0, %v1219
    %v1221 = vmul.f32 %v1205, %v365
    %v1222 = vmul.f32 %v1220, %v365
    %v1223 = vadd.f32 %v1221, %v366
    %v1224 = vadd.f32 %v1222, %v366
    %v1225 = vmul.f32 %v1223, %v1030
    %v1226 = vmul.f32 %v1224, %v1031
    %1229 = vrot.lane.b32.xlu0 %v1223, 64
    %v1230 = vpop.permute.xlu0 %1229
    %1231 = vrot.lane.b32.xlu0 %v1224, 64
    %v1232 = vpop.permute.xlu0 %1231
    %v1235 = vmul.f32 %v1223, %v1230
    %v1236 = vmul.f32 %v1224, %v1232
    %1239 = vrot.lane.b32.xlu0 %v1235, 32
    %v1240 = vpop.permute.xlu0 %1239
    %1241 = vrot.lane.b32.xlu0 %v1236, 32
    %v1242 = vpop.permute.xlu0 %1241
    %v1245 = vadd.f32 %v1225, %v1240
    %v1246 = vadd.f32 %v1226, %v1242
    %v1247 = vtanh.pop %v1245
    %v1248 = vtanh.pop %v1246
    %1251 = vrot.lane.b32.xlu0 %v1247, 64
    %v1252 = vpop.permute.xlu0 %1251
    %1253 = vrot.lane.b32.xlu0 %v1248, 64
    %v1254 = vpop.permute.xlu0 %1253
    %v1257 = vmul.f32 %v1223, %v1252
    %v1258 = vmul.f32 %v1224, %v1254
    %v1259 = vpack.c.bf16 %v1258, %v1257
    %1261 = vrot.lane.b32.xlu0 %v1259, 32
    %v1262 = vpop.permute.xlu0 %1261
    %v1264 = vsel %vm379, %v1262, 0
    %1266 = vmatpush.bf16.msra.mxu0 0
    %1267 = vmatpush.bf16.msra.mxu0 0
    %1268 = vmatpush.bf16.msra.mxu0 0
    %1269 = vmatpush.bf16.msra.mxu0 0
    %1270 = vmatpush.bf16.msra.mxu0 0
    %1271 = vmatpush.bf16.msra.mxu0 0
    %1272 = vmatpush.bf16.msra.mxu0 %v376
    %1273 = vmatpush.bf16.msra.mxu0 %v375
    %1274 = vmatmul.bf16.gmra.mxu0 %v1264
    %v1275 = vpop.f32.mrf.mxu0
    %v1276 = vadd.f32 0.0, %v1275
    %v1277 = vpop.f32.mrf.mxu0
    %v1278 = vadd.f32 0.0, %v1277
    %1279 = vdwg.mxu0
    %s1280 = scalar_lea.vmem [#allocation2], 64
    %v1281 = vld [vmem:[%s1280] sm:$0xff]
    %v1282 = vld [vmem:[%s1280 + $0x8] sm:$0xff]
    %1283 = vmatpush.bf16.msra.mxu0 0
    %1284 = vmatpush.bf16.msra.mxu0 0
    %1285 = vmatpush.bf16.msra.mxu0 0
    %1286 = vmatpush.bf16.msra.mxu0 0
    %1287 = vmatpush.bf16.msra.mxu0 0
    %1288 = vmatpush.bf16.msra.mxu0 0
    %1289 = vmatpush.bf16.msra.mxu0 %v408
    %1290 = vmatpush.bf16.msra.mxu0 %v407
    %1291 = vmatmul.bf16.gmra.mxu0 %v1165
    %v1292 = vpop.f32.mrf.mxu0
    %v1293 = vadd.f32 0.0, %v1292
    %v1294 = vpop.f32.mrf.mxu0
    %v1295 = vadd.f32 0.0, %v1294
    %1296 = vdwg.mxu0
    %v1297 = vadd.f32 %v1281, %v1293
    %v1298 = vadd.f32 %v1282, %v1295
    %v1299 = vxor.u32 %v1297, 2147483648
    %v1300 = vxor.u32 %v1298, 2147483648
    %v1301 = vmul.f32 %v1299, 1.442695
    %v1302 = vpow.pop %v1301
    %v1303 = vmul.f32 %v1300, 1.442695
    %v1304 = vpow.pop %v1303
    %v1305 = vadd.f32 %v1302, 1.0
    %v1306 = vadd.f32 %v1304, 1.0
    %v1307 = vrcp.pop %v1305
    %v1308 = vmul.f32 %v1305, %v1307
    %v1309 = vsub.f32 1.0, %v1308
    %v1310 = vmul.f32 %v1307, %v1309
    %v1311 = vadd.f32 %v1307, %v1310
    %vm1312 = vweird.f32 %v1305
    %vm1313 = vweird.f32 %v1307
    %vm1314 = vmor %vm1312, %vm1313
    %v1315 = vsel %vm1314, %v1307, %v1311
    %v1316 = vand.u32 2147483647, %v1305
    %vm1317 = vcmp.eq.f32.partialorder %v1316, 8.507059e+37
    %v1318 = vand.u32 %v1305, 2147483648
    %v1319 = vor.u32 1.1754944e-38, %v1318
    %v1320 = vsel %vm1317, %v1319, %v1315
    %v1321 = vmul.f32 1.0, %v1320
    %v1322 = vrcp.pop %v1306
    %v1323 = vmul.f32 %v1306, %v1322
    %v1324 = vsub.f32 1.0, %v1323
    %v1325 = vmul.f32 %v1322, %v1324
    %v1326 = vadd.f32 %v1322, %v1325
    %vm1327 = vweird.f32 %v1306
    %vm1328 = vweird.f32 %v1322
    %vm1329 = vmor %vm1327, %vm1328
    %v1330 = vsel %vm1329, %v1322, %v1326
    %v1331 = vand.u32 2147483647, %v1306
    %vm1332 = vcmp.eq.f32.partialorder %v1331, 8.507059e+37
    %v1333 = vand.u32 %v1306, 2147483648
    %v1334 = vor.u32 1.1754944e-38, %v1333
    %v1335 = vsel %vm1332, %v1334, %v1330
    %v1336 = vmul.f32 1.0, %v1335
    %v1337 = vmul.f32 %v1321, %v365
    %v1338 = vmul.f32 %v1336, %v365
    %v1339 = vadd.f32 %v1337, %v366
    %v1340 = vadd.f32 %v1338, %v366
    %v1341 = vmul.f32 %v1339, %v1146
    %v1342 = vmul.f32 %v1340, %v1147
    %1345 = vrot.lane.b32.xlu0 %v1339, 64
    %v1346 = vpop.permute.xlu0 %1345
    %1347 = vrot.lane.b32.xlu0 %v1340, 64
    %v1348 = vpop.permute.xlu0 %1347
    %v1351 = vmul.f32 %v1339, %v1346
    %v1352 = vmul.f32 %v1340, %v1348
    %1355 = vrot.lane.b32.xlu0 %v1351, 32
    %v1356 = vpop.permute.xlu0 %1355
    %1357 = vrot.lane.b32.xlu0 %v1352, 32
    %v1358 = vpop.permute.xlu0 %1357
    %v1361 = vadd.f32 %v1341, %v1356
    %v1362 = vadd.f32 %v1342, %v1358
    %v1363 = vtanh.pop %v1361
    %v1364 = vtanh.pop %v1362
    %1367 = vrot.lane.b32.xlu0 %v1363, 64
    %v1368 = vpop.permute.xlu0 %1367
    %1369 = vrot.lane.b32.xlu0 %v1364, 64
    %v1370 = vpop.permute.xlu0 %1369
    %v1373 = vmul.f32 %v1339, %v1368
    %v1374 = vmul.f32 %v1340, %v1370
    %v1375 = vpack.c.bf16 %v1374, %v1373
    %1377 = vrot.lane.b32.xlu0 %v1375, 32
    %v1378 = vpop.permute.xlu0 %1377
    %v1380 = vsel %vm379, %v1378, 0
    %1382 = vmatpush.bf16.msra.mxu0 0
    %1383 = vmatpush.bf16.msra.mxu0 0
    %1384 = vmatpush.bf16.msra.mxu0 0
    %1385 = vmatpush.bf16.msra.mxu0 0
    %1386 = vmatpush.bf16.msra.mxu0 0
    %1387 = vmatpush.bf16.msra.mxu0 0
    %1388 = vmatpush.bf16.msra.mxu0 %v516
    %1389 = vmatpush.bf16.msra.mxu0 %v515
    %1390 = vmatmul.bf16.gmra.mxu0 %v1380
    %v1391 = vpop.f32.mrf.mxu0
    %v1392 = vadd.f32 %v1276, %v1391
    %v1393 = vpop.f32.mrf.mxu0
    %v1394 = vadd.f32 %v1278, %v1393
    %1395 = vdwg.mxu0
    %v1396 = vadd.f32 %v1392, %v358
    %v1397 = vadd.f32 %v1394, %v358
    %v1398 = vxor.u32 %v1396, 2147483648
    %v1399 = vxor.u32 %v1397, 2147483648
    %v1400 = vmul.f32 %v1398, 1.442695
    %v1401 = vpow.pop %v1400
    %v1402 = vmul.f32 %v1399, 1.442695
    %v1403 = vpow.pop %v1402
    %v1404 = vadd.f32 %v1401, 1.0
    %v1405 = vadd.f32 %v1403, 1.0
    %v1406 = vrcp.pop %v1404
    %v1407 = vmul.f32 %v1404, %v1406
    %v1408 = vsub.f32 1.0, %v1407
    %v1409 = vmul.f32 %v1406, %v1408
    %v1410 = vadd.f32 %v1406, %v1409
    %vm1411 = vweird.f32 %v1404
    %vm1412 = vweird.f32 %v1406
    %vm1413 = vmor %vm1411, %vm1412
    %v1414 = vsel %vm1413, %v1406, %v1410
    %v1415 = vand.u32 2147483647, %v1404
    %vm1416 = vcmp.eq.f32.partialorder %v1415, 8.507059e+37
    %v1417 = vand.u32 %v1404, 2147483648
    %v1418 = vor.u32 1.1754944e-38, %v1417
    %v1419 = vsel %vm1416, %v1418, %v1414
    %v1420 = vmul.f32 1.0, %v1419
    %v1421 = vrcp.pop %v1405
    %v1422 = vmul.f32 %v1405, %v1421
    %v1423 = vsub.f32 1.0, %v1422
    %v1424 = vmul.f32 %v1421, %v1423
    %v1425 = vadd.f32 %v1421, %v1424
    %vm1426 = vweird.f32 %v1405
    %vm1427 = vweird.f32 %v1421
    %vm1428 = vmor %vm1426, %vm1427
    %v1429 = vsel %vm1428, %v1421, %v1425
    %v1430 = vand.u32 2147483647, %v1405
    %vm1431 = vcmp.eq.f32.partialorder %v1430, 8.507059e+37
    %v1432 = vand.u32 %v1405, 2147483648
    %v1433 = vor.u32 1.1754944e-38, %v1432
    %v1434 = vsel %vm1431, %v1433, %v1429
    %v1435 = vmul.f32 1.0, %v1434
    %v1436 = vmul.f32 %v1420, %v365
    %v1437 = vmul.f32 %v1435, %v365
    %v1438 = vadd.f32 %v1436, %v366
    %v1439 = vadd.f32 %v1437, %v366
    %v1440 = vmul.f32 %v1438, %v1245
    %v1441 = vmul.f32 %v1439, %v1246
    %1444 = vrot.lane.b32.xlu0 %v1438, 64
    %v1445 = vpop.permute.xlu0 %1444
    %1446 = vrot.lane.b32.xlu0 %v1439, 64
    %v1447 = vpop.permute.xlu0 %1446
    %v1450 = vmul.f32 %v1438, %v1445
    %v1451 = vmul.f32 %v1439, %v1447
    %1454 = vrot.lane.b32.xlu0 %v1450, 32
    %v1455 = vpop.permute.xlu0 %1454
    %1456 = vrot.lane.b32.xlu0 %v1451, 32
    %v1457 = vpop.permute.xlu0 %1456
    %v1460 = vadd.f32 %v1440, %v1455
    %v1461 = vadd.f32 %v1441, %v1457
    %v1462 = vtanh.pop %v1460
    %v1463 = vtanh.pop %v1461
    %1466 = vrot.lane.b32.xlu0 %v1462, 64
    %v1467 = vpop.permute.xlu0 %1466
    %1468 = vrot.lane.b32.xlu0 %v1463, 64
    %v1469 = vpop.permute.xlu0 %1468
    %v1472 = vmul.f32 %v1438, %v1467
    %v1473 = vmul.f32 %v1439, %v1469
    %v1474 = vpack.c.bf16 %v1473, %v1472
    %1476 = vrot.lane.b32.xlu0 %v1474, 32
    %v1477 = vpop.permute.xlu0 %1476
    %v1479 = vsel %vm379, %v1477, 0
    %1481 = vmatpush.bf16.msra.mxu0 0
    %1482 = vmatpush.bf16.msra.mxu0 0
    %1483 = vmatpush.bf16.msra.mxu0 0
    %1484 = vmatpush.bf16.msra.mxu0 0
    %1485 = vmatpush.bf16.msra.mxu0 0
    %1486 = vmatpush.bf16.msra.mxu0 0
    %1487 = vmatpush.bf16.msra.mxu0 %v376
    %1488 = vmatpush.bf16.msra.mxu0 %v375
    %1489 = vmatmul.bf16.gmra.mxu0 %v1479
    %v1490 = vpop.f32.mrf.mxu0
    %v1491 = vadd.f32 0.0, %v1490
    %v1492 = vpop.f32.mrf.mxu0
    %v1493 = vadd.f32 0.0, %v1492
    %1494 = vdwg.mxu0
    %s1495 = scalar_lea.vmem [#allocation2], 80
    %v1496 = vld [vmem:[%s1495] sm:$0xff]
    %v1497 = vld [vmem:[%s1495 + $0x8] sm:$0xff]
    %1498 = vmatpush.bf16.msra.mxu0 0
    %1499 = vmatpush.bf16.msra.mxu0 0
    %1500 = vmatpush.bf16.msra.mxu0 0
    %1501 = vmatpush.bf16.msra.mxu0 0
    %1502 = vmatpush.bf16.msra.mxu0 0
    %1503 = vmatpush.bf16.msra.mxu0 0
    %1504 = vmatpush.bf16.msra.mxu0 %v408
    %1505 = vmatpush.bf16.msra.mxu0 %v407
    %1506 = vmatmul.bf16.gmra.mxu0 %v1380
    %v1507 = vpop.f32.mrf.mxu0
    %v1508 = vadd.f32 0.0, %v1507
    %v1509 = vpop.f32.mrf.mxu0
    %v1510 = vadd.f32 0.0, %v1509
    %1511 = vdwg.mxu0
    %v1512 = vadd.f32 %v1496, %v1508
    %v1513 = vadd.f32 %v1497, %v1510
    %v1514 = vxor.u32 %v1512, 2147483648
    %v1515 = vxor.u32 %v1513, 2147483648
    %v1516 = vmul.f32 %v1514, 1.442695
    %v1517 = vpow.pop %v1516
    %v1518 = vmul.f32 %v1515, 1.442695
    %v1519 = vpow.pop %v1518
    %v1520 = vadd.f32 %v1517, 1.0
    %v1521 = vadd.f32 %v1519, 1.0
    %v1522 = vrcp.pop %v1520
    %v1523 = vmul.f32 %v1520, %v1522
    %v1524 = vsub.f32 1.0, %v1523
    %v1525 = vmul.f32 %v1522, %v1524
    %v1526 = vadd.f32 %v1522, %v1525
    %vm1527 = vweird.f32 %v1520
    %vm1528 = vweird.f32 %v1522
    %vm1529 = vmor %vm1527, %vm1528
    %v1530 = vsel %vm1529, %v1522, %v1526
    %v1531 = vand.u32 2147483647, %v1520
    %vm1532 = vcmp.eq.f32.partialorder %v1531, 8.507059e+37
    %v1533 = vand.u32 %v1520, 2147483648
    %v1534 = vor.u32 1.1754944e-38, %v1533
    %v1535 = vsel %vm1532, %v1534, %v1530
    %v1536 = vmul.f32 1.0, %v1535
    %v1537 = vrcp.pop %v1521
    %v1538 = vmul.f32 %v1521, %v1537
    %v1539 = vsub.f32 1.0, %v1538
    %v1540 = vmul.f32 %v1537, %v1539
    %v1541 = vadd.f32 %v1537, %v1540
    %vm1542 = vweird.f32 %v1521
    %vm1543 = vweird.f32 %v1537
    %vm1544 = vmor %vm1542, %vm1543
    %v1545 = vsel %vm1544, %v1537, %v1541
    %v1546 = vand.u32 2147483647, %v1521
    %vm1547 = vcmp.eq.f32.partialorder %v1546, 8.507059e+37
    %v1548 = vand.u32 %v1521, 2147483648
    %v1549 = vor.u32 1.1754944e-38, %v1548
    %v1550 = vsel %vm1547, %v1549, %v1545
    %v1551 = vmul.f32 1.0, %v1550
    %v1552 = vmul.f32 %v1536, %v365
    %v1553 = vmul.f32 %v1551, %v365
    %v1554 = vadd.f32 %v1552, %v366
    %v1555 = vadd.f32 %v1553, %v366
    %v1556 = vmul.f32 %v1554, %v1361
    %v1557 = vmul.f32 %v1555, %v1362
    %1560 = vrot.lane.b32.xlu0 %v1554, 64
    %v1561 = vpop.permute.xlu0 %1560
    %1562 = vrot.lane.b32.xlu0 %v1555, 64
    %v1563 = vpop.permute.xlu0 %1562
    %v1566 = vmul.f32 %v1554, %v1561
    %v1567 = vmul.f32 %v1555, %v1563
    %1570 = vrot.lane.b32.xlu0 %v1566, 32
    %v1571 = vpop.permute.xlu0 %1570
    %1572 = vrot.lane.b32.xlu0 %v1567, 32
    %v1573 = vpop.permute.xlu0 %1572
    %v1576 = vadd.f32 %v1556, %v1571
    %v1577 = vadd.f32 %v1557, %v1573
    %v1578 = vtanh.pop %v1576
    %v1579 = vtanh.pop %v1577
    %1582 = vrot.lane.b32.xlu0 %v1578, 64
    %v1583 = vpop.permute.xlu0 %1582
    %1584 = vrot.lane.b32.xlu0 %v1579, 64
    %v1585 = vpop.permute.xlu0 %1584
    %v1588 = vmul.f32 %v1554, %v1583
    %v1589 = vmul.f32 %v1555, %v1585
    %v1590 = vpack.c.bf16 %v1589, %v1588
    %1592 = vrot.lane.b32.xlu0 %v1590, 32
    %v1593 = vpop.permute.xlu0 %1592
    %v1595 = vsel %vm379, %v1593, 0
    %1597 = vmatpush.bf16.msra.mxu0 0
    %1598 = vmatpush.bf16.msra.mxu0 0
    %1599 = vmatpush.bf16.msra.mxu0 0
    %1600 = vmatpush.bf16.msra.mxu0 0
    %1601 = vmatpush.bf16.msra.mxu0 0
    %1602 = vmatpush.bf16.msra.mxu0 0
    %1603 = vmatpush.bf16.msra.mxu0 %v516
    %1604 = vmatpush.bf16.msra.mxu0 %v515
    %1605 = vmatmul.bf16.gmra.mxu0 %v1595
    %v1606 = vpop.f32.mrf.mxu0
    %v1607 = vadd.f32 %v1491, %v1606
    %v1608 = vpop.f32.mrf.mxu0
    %v1609 = vadd.f32 %v1493, %v1608
    %1610 = vdwg.mxu0
    %v1611 = vadd.f32 %v1607, %v358
    %v1612 = vadd.f32 %v1609, %v358
    %v1613 = vxor.u32 %v1611, 2147483648
    %v1614 = vxor.u32 %v1612, 2147483648
    %v1615 = vmul.f32 %v1613, 1.442695
    %v1616 = vpow.pop %v1615
    %v1617 = vmul.f32 %v1614, 1.442695
    %v1618 = vpow.pop %v1617
    %v1619 = vadd.f32 %v1616, 1.0
    %v1620 = vadd.f32 %v1618, 1.0
    %v1621 = vrcp.pop %v1619
    %v1622 = vmul.f32 %v1619, %v1621
    %v1623 = vsub.f32 1.0, %v1622
    %v1624 = vmul.f32 %v1621, %v1623
    %v1625 = vadd.f32 %v1621, %v1624
    %vm1626 = vweird.f32 %v1619
    %vm1627 = vweird.f32 %v1621
    %vm1628 = vmor %vm1626, %vm1627
    %v1629 = vsel %vm1628, %v1621, %v1625
    %v1630 = vand.u32 2147483647, %v1619
    %vm1631 = vcmp.eq.f32.partialorder %v1630, 8.507059e+37
    %v1632 = vand.u32 %v1619, 2147483648
    %v1633 = vor.u32 1.1754944e-38, %v1632
    %v1634 = vsel %vm1631, %v1633, %v1629
    %v1635 = vmul.f32 1.0, %v1634
    %v1636 = vrcp.pop %v1620
    %v1637 = vmul.f32 %v1620, %v1636
    %v1638 = vsub.f32 1.0, %v1637
    %v1639 = vmul.f32 %v1636, %v1638
    %v1640 = vadd.f32 %v1636, %v1639
    %vm1641 = vweird.f32 %v1620
    %vm1642 = vweird.f32 %v1636
    %vm1643 = vmor %vm1641, %vm1642
    %v1644 = vsel %vm1643, %v1636, %v1640
    %v1645 = vand.u32 2147483647, %v1620
    %vm1646 = vcmp.eq.f32.partialorder %v1645, 8.507059e+37
    %v1647 = vand.u32 %v1620, 2147483648
    %v1648 = vor.u32 1.1754944e-38, %v1647
    %v1649 = vsel %vm1646, %v1648, %v1644
    %v1650 = vmul.f32 1.0, %v1649
    %v1651 = vmul.f32 %v1635, %v365
    %v1652 = vmul.f32 %v1650, %v365
    %v1653 = vadd.f32 %v1651, %v366
    %v1654 = vadd.f32 %v1652, %v366
    %v1655 = vmul.f32 %v1653, %v1460
    %v1656 = vmul.f32 %v1654, %v1461
    %1659 = vrot.lane.b32.xlu0 %v1653, 64
    %v1660 = vpop.permute.xlu0 %1659
    %1661 = vrot.lane.b32.xlu0 %v1654, 64
    %v1662 = vpop.permute.xlu0 %1661
    %v1665 = vmul.f32 %v1653, %v1660
    %v1666 = vmul.f32 %v1654, %v1662
    %1669 = vrot.lane.b32.xlu0 %v1665, 32
    %v1670 = vpop.permute.xlu0 %1669
    %1671 = vrot.lane.b32.xlu0 %v1666, 32
    %v1672 = vpop.permute.xlu0 %1671
    %v1675 = vadd.f32 %v1655, %v1670
    %v1676 = vadd.f32 %v1656, %v1672
    %v1677 = vtanh.pop %v1675
    %v1678 = vtanh.pop %v1676
    %1681 = vrot.lane.b32.xlu0 %v1677, 64
    %v1682 = vpop.permute.xlu0 %1681
    %1683 = vrot.lane.b32.xlu0 %v1678, 64
    %v1684 = vpop.permute.xlu0 %1683
    %v1687 = vmul.f32 %v1653, %v1682
    %v1688 = vmul.f32 %v1654, %v1684
    %v1689 = vpack.c.bf16 %v1688, %v1687
    %1691 = vrot.lane.b32.xlu0 %v1689, 32
    %v1692 = vpop.permute.xlu0 %1691
    %v1694 = vsel %vm379, %v1692, 0
    %1696 = vmatpush.bf16.msra.mxu0 0
    %1697 = vmatpush.bf16.msra.mxu0 0
    %1698 = vmatpush.bf16.msra.mxu0 0
    %1699 = vmatpush.bf16.msra.mxu0 0
    %1700 = vmatpush.bf16.msra.mxu0 0
    %1701 = vmatpush.bf16.msra.mxu0 0
    %1702 = vmatpush.bf16.msra.mxu0 %v376
    %1703 = vmatpush.bf16.msra.mxu0 %v375
    %1704 = vmatmul.bf16.gmra.mxu0 %v1694
    %v1705 = vpop.f32.mrf.mxu0
    %v1706 = vadd.f32 0.0, %v1705
    %v1707 = vpop.f32.mrf.mxu0
    %v1708 = vadd.f32 0.0, %v1707
    %1709 = vdwg.mxu0
    %s1710 = scalar_lea.vmem [#allocation2], 96
    %v1711 = vld [vmem:[%s1710] sm:$0xff]
    %v1712 = vld [vmem:[%s1710 + $0x8] sm:$0xff]
    %1713 = vmatpush.bf16.msra.mxu0 0
    %1714 = vmatpush.bf16.msra.mxu0 0
    %1715 = vmatpush.bf16.msra.mxu0 0
    %1716 = vmatpush.bf16.msra.mxu0 0
    %1717 = vmatpush.bf16.msra.mxu0 0
    %1718 = vmatpush.bf16.msra.mxu0 0
    %1719 = vmatpush.bf16.msra.mxu0 %v408
    %1720 = vmatpush.bf16.msra.mxu0 %v407
    %1721 = vmatmul.bf16.gmra.mxu0 %v1595
    %v1722 = vpop.f32.mrf.mxu0
    %v1723 = vadd.f32 0.0, %v1722
    %v1724 = vpop.f32.mrf.mxu0
    %v1725 = vadd.f32 0.0, %v1724
    %1726 = vdwg.mxu0
    %v1727 = vadd.f32 %v1711, %v1723
    %v1728 = vadd.f32 %v1712, %v1725
    %v1729 = vxor.u32 %v1727, 2147483648
    %v1730 = vxor.u32 %v1728, 2147483648
    %v1731 = vmul.f32 %v1729, 1.442695
    %v1732 = vpow.pop %v1731
    %v1733 = vmul.f32 %v1730, 1.442695
    %v1734 = vpow.pop %v1733
    %v1735 = vadd.f32 %v1732, 1.0
    %v1736 = vadd.f32 %v1734, 1.0
    %v1737 = vrcp.pop %v1735
    %v1738 = vmul.f32 %v1735, %v1737
    %v1739 = vsub.f32 1.0, %v1738
    %v1740 = vmul.f32 %v1737, %v1739
    %v1741 = vadd.f32 %v1737, %v1740
    %vm1742 = vweird.f32 %v1735
    %vm1743 = vweird.f32 %v1737
    %vm1744 = vmor %vm1742, %vm1743
    %v1745 = vsel %vm1744, %v1737, %v1741
    %v1746 = vand.u32 2147483647, %v1735
    %vm1747 = vcmp.eq.f32.partialorder %v1746, 8.507059e+37
    %v1748 = vand.u32 %v1735, 2147483648
    %v1749 = vor.u32 1.1754944e-38, %v1748
    %v1750 = vsel %vm1747, %v1749, %v1745
    %v1751 = vmul.f32 1.0, %v1750
    %v1752 = vrcp.pop %v1736
    %v1753 = vmul.f32 %v1736, %v1752
    %v1754 = vsub.f32 1.0, %v1753
    %v1755 = vmul.f32 %v1752, %v1754
    %v1756 = vadd.f32 %v1752, %v1755
    %vm1757 = vweird.f32 %v1736
    %vm1758 = vweird.f32 %v1752
    %vm1759 = vmor %vm1757, %vm1758
    %v1760 = vsel %vm1759, %v1752, %v1756
    %v1761 = vand.u32 2147483647, %v1736
    %vm1762 = vcmp.eq.f32.partialorder %v1761, 8.507059e+37
    %v1763 = vand.u32 %v1736, 2147483648
    %v1764 = vor.u32 1.1754944e-38, %v1763
    %v1765 = vsel %vm1762, %v1764, %v1760
    %v1766 = vmul.f32 1.0, %v1765
    %v1767 = vmul.f32 %v1751, %v365
    %v1768 = vmul.f32 %v1766, %v365
    %v1769 = vadd.f32 %v1767, %v366
    %v1770 = vadd.f32 %v1768, %v366
    %v1771 = vmul.f32 %v1769, %v1576
    %v1772 = vmul.f32 %v1770, %v1577
    %1775 = vrot.lane.b32.xlu0 %v1769, 64
    %v1776 = vpop.permute.xlu0 %1775
    %1777 = vrot.lane.b32.xlu0 %v1770, 64
    %v1778 = vpop.permute.xlu0 %1777
    %v1781 = vmul.f32 %v1769, %v1776
    %v1782 = vmul.f32 %v1770, %v1778
    %1785 = vrot.lane.b32.xlu0 %v1781, 32
    %v1786 = vpop.permute.xlu0 %1785
    %1787 = vrot.lane.b32.xlu0 %v1782, 32
    %v1788 = vpop.permute.xlu0 %1787
    %v1791 = vadd.f32 %v1771, %v1786
    %v1792 = vadd.f32 %v1772, %v1788
    %v1793 = vtanh.pop %v1791
    %v1794 = vtanh.pop %v1792
    %1797 = vrot.lane.b32.xlu0 %v1793, 64
    %v1798 = vpop.permute.xlu0 %1797
    %1799 = vrot.lane.b32.xlu0 %v1794, 64
    %v1800 = vpop.permute.xlu0 %1799
    %v1803 = vmul.f32 %v1769, %v1798
    %v1804 = vmul.f32 %v1770, %v1800
    %v1805 = vpack.c.bf16 %v1804, %v1803
    %1807 = vrot.lane.b32.xlu0 %v1805, 32
    %v1808 = vpop.permute.xlu0 %1807
    %v1810 = vsel %vm379, %v1808, 0
    %1812 = vmatpush.bf16.msra.mxu0 0
    %1813 = vmatpush.bf16.msra.mxu0 0
    %1814 = vmatpush.bf16.msra.mxu0 0
    %1815 = vmatpush.bf16.msra.mxu0 0
    %1816 = vmatpush.bf16.msra.mxu0 0
    %1817 = vmatpush.bf16.msra.mxu0 0
    %1818 = vmatpush.bf16.msra.mxu0 %v516
    %1819 = vmatpush.bf16.msra.mxu0 %v515
    %1820 = vmatmul.bf16.gmra.mxu0 %v1810
    %v1821 = vpop.f32.mrf.mxu0
    %v1822 = vadd.f32 %v1706, %v1821
    %v1823 = vpop.f32.mrf.mxu0
    %v1824 = vadd.f32 %v1708, %v1823
    %1825 = vdwg.mxu0
    %v1826 = vadd.f32 %v1822, %v358
    %v1827 = vadd.f32 %v1824, %v358
    %v1828 = vxor.u32 %v1826, 2147483648
    %v1829 = vxor.u32 %v1827, 2147483648
    %v1830 = vmul.f32 %v1828, 1.442695
    %v1831 = vpow.pop %v1830
    %v1832 = vmul.f32 %v1829, 1.442695
    %v1833 = vpow.pop %v1832
    %v1834 = vadd.f32 %v1831, 1.0
    %v1835 = vadd.f32 %v1833, 1.0
    %v1836 = vrcp.pop %v1834
    %v1837 = vmul.f32 %v1834, %v1836
    %v1838 = vsub.f32 1.0, %v1837
    %v1839 = vmul.f32 %v1836, %v1838
    %v1840 = vadd.f32 %v1836, %v1839
    %vm1841 = vweird.f32 %v1834
    %vm1842 = vweird.f32 %v1836
    %vm1843 = vmor %vm1841, %vm1842
    %v1844 = vsel %vm1843, %v1836, %v1840
    %v1845 = vand.u32 2147483647, %v1834
    %vm1846 = vcmp.eq.f32.partialorder %v1845, 8.507059e+37
    %v1847 = vand.u32 %v1834, 2147483648
    %v1848 = vor.u32 1.1754944e-38, %v1847
    %v1849 = vsel %vm1846, %v1848, %v1844
    %v1850 = vmul.f32 1.0, %v1849
    %v1851 = vrcp.pop %v1835
    %v1852 = vmul.f32 %v1835, %v1851
    %v1853 = vsub.f32 1.0, %v1852
    %v1854 = vmul.f32 %v1851, %v1853
    %v1855 = vadd.f32 %v1851, %v1854
    %vm1856 = vweird.f32 %v1835
    %vm1857 = vweird.f32 %v1851
    %vm1858 = vmor %vm1856, %vm1857
    %v1859 = vsel %vm1858, %v1851, %v1855
    %v1860 = vand.u32 2147483647, %v1835
    %vm1861 = vcmp.eq.f32.partialorder %v1860, 8.507059e+37
    %v1862 = vand.u32 %v1835, 2147483648
    %v1863 = vor.u32 1.1754944e-38, %v1862
    %v1864 = vsel %vm1861, %v1863, %v1859
    %v1865 = vmul.f32 1.0, %v1864
    %v1866 = vmul.f32 %v1850, %v365
    %v1867 = vmul.f32 %v1865, %v365
    %v1868 = vadd.f32 %v1866, %v366
    %v1869 = vadd.f32 %v1867, %v366
    %v1870 = vmul.f32 %v1868, %v1675
    %v1871 = vmul.f32 %v1869, %v1676
    %1874 = vrot.lane.b32.xlu0 %v1868, 64
    %v1875 = vpop.permute.xlu0 %1874
    %1876 = vrot.lane.b32.xlu0 %v1869, 64
    %v1877 = vpop.permute.xlu0 %1876
    %v1880 = vmul.f32 %v1868, %v1875
    %v1881 = vmul.f32 %v1869, %v1877
    %1884 = vrot.lane.b32.xlu0 %v1880, 32
    %v1885 = vpop.permute.xlu0 %1884
    %1886 = vrot.lane.b32.xlu0 %v1881, 32
    %v1887 = vpop.permute.xlu0 %1886
    %v1890 = vadd.f32 %v1870, %v1885
    %v1891 = vadd.f32 %v1871, %v1887
    %v1892 = vtanh.pop %v1890
    %v1893 = vtanh.pop %v1891
    %1896 = vrot.lane.b32.xlu0 %v1892, 64
    %v1897 = vpop.permute.xlu0 %1896
    %1898 = vrot.lane.b32.xlu0 %v1893, 64
    %v1899 = vpop.permute.xlu0 %1898
    %v1902 = vmul.f32 %v1868, %v1897
    %v1903 = vmul.f32 %v1869, %v1899
    %v1904 = vpack.c.bf16 %v1903, %v1902
    %1906 = vrot.lane.b32.xlu0 %v1904, 32
    %v1907 = vpop.permute.xlu0 %1906
    %v1909 = vsel %vm379, %v1907, 0
    %1911 = vmatpush.bf16.msra.mxu0 0
    %1912 = vmatpush.bf16.msra.mxu0 0
    %1913 = vmatpush.bf16.msra.mxu0 0
    %1914 = vmatpush.bf16.msra.mxu0 0
    %1915 = vmatpush.bf16.msra.mxu0 0
    %1916 = vmatpush.bf16.msra.mxu0 0
    %1917 = vmatpush.bf16.msra.mxu0 %v376
    %1918 = vmatpush.bf16.msra.mxu0 %v375
    %1919 = vmatmul.bf16.gmra.mxu0 %v1909
    %v1920 = vpop.f32.mrf.mxu0
    %v1921 = vadd.f32 0.0, %v1920
    %v1922 = vpop.f32.mrf.mxu0
    %v1923 = vadd.f32 0.0, %v1922
    %1924 = vdwg.mxu0
    %s1925 = scalar_lea.vmem [#allocation2], 112
    %v1926 = vld [vmem:[%s1925] sm:$0xff]
    %v1927 = vld [vmem:[%s1925 + $0x8] sm:$0xff]
    %1928 = vmatpush.bf16.msra.mxu0 0
    %1929 = vmatpush.bf16.msra.mxu0 0
    %1930 = vmatpush.bf16.msra.mxu0 0
    %1931 = vmatpush.bf16.msra.mxu0 0
    %1932 = vmatpush.bf16.msra.mxu0 0
    %1933 = vmatpush.bf16.msra.mxu0 0
    %1934 = vmatpush.bf16.msra.mxu0 %v408
    %1935 = vmatpush.bf16.msra.mxu0 %v407
    %1936 = vmatmul.bf16.gmra.mxu0 %v1810
    %v1937 = vpop.f32.mrf.mxu0
    %v1938 = vadd.f32 0.0, %v1937
    %v1939 = vpop.f32.mrf.mxu0
    %v1940 = vadd.f32 0.0, %v1939
    %1941 = vdwg.mxu0
    %v1942 = vadd.f32 %v1926, %v1938
    %v1943 = vadd.f32 %v1927, %v1940
    %v1944 = vxor.u32 %v1942, 2147483648
    %v1945 = vxor.u32 %v1943, 2147483648
    %v1946 = vmul.f32 %v1944, 1.442695
    %v1947 = vpow.pop %v1946
    %v1948 = vmul.f32 %v1945, 1.442695
    %v1949 = vpow.pop %v1948
    %v1950 = vadd.f32 %v1947, 1.0
    %v1951 = vadd.f32 %v1949, 1.0
    %v1952 = vrcp.pop %v1950
    %v1953 = vmul.f32 %v1950, %v1952
    %v1954 = vsub.f32 1.0, %v1953
    %v1955 = vmul.f32 %v1952, %v1954
    %v1956 = vadd.f32 %v1952, %v1955
    %vm1957 = vweird.f32 %v1950
    %vm1958 = vweird.f32 %v1952
    %vm1959 = vmor %vm1957, %vm1958
    %v1960 = vsel %vm1959, %v1952, %v1956
    %v1961 = vand.u32 2147483647, %v1950
    %vm1962 = vcmp.eq.f32.partialorder %v1961, 8.507059e+37
    %v1963 = vand.u32 %v1950, 2147483648
    %v1964 = vor.u32 1.1754944e-38, %v1963
    %v1965 = vsel %vm1962, %v1964, %v1960
    %v1966 = vmul.f32 1.0, %v1965
    %v1967 = vrcp.pop %v1951
    %v1968 = vmul.f32 %v1951, %v1967
    %v1969 = vsub.f32 1.0, %v1968
    %v1970 = vmul.f32 %v1967, %v1969
    %v1971 = vadd.f32 %v1967, %v1970
    %vm1972 = vweird.f32 %v1951
    %vm1973 = vweird.f32 %v1967
    %vm1974 = vmor %vm1972, %vm1973
    %v1975 = vsel %vm1974, %v1967, %v1971
    %v1976 = vand.u32 2147483647, %v1951
    %vm1977 = vcmp.eq.f32.partialorder %v1976, 8.507059e+37
    %v1978 = vand.u32 %v1951, 2147483648
    %v1979 = vor.u32 1.1754944e-38, %v1978
    %v1980 = vsel %vm1977, %v1979, %v1975
    %v1981 = vmul.f32 1.0, %v1980
    %v1982 = vmul.f32 %v1966, %v365
    %v1983 = vmul.f32 %v1981, %v365
    %v1984 = vadd.f32 %v1982, %v366
    %v1985 = vadd.f32 %v1983, %v366
    %v1986 = vmul.f32 %v1984, %v1791
    %v1987 = vmul.f32 %v1985, %v1792
    %1990 = vrot.lane.b32.xlu0 %v1984, 64
    %v1991 = vpop.permute.xlu0 %1990
    %1992 = vrot.lane.b32.xlu0 %v1985, 64
    %v1993 = vpop.permute.xlu0 %1992
    %v1996 = vmul.f32 %v1984, %v1991
    %v1997 = vmul.f32 %v1985, %v1993
    %2000 = vrot.lane.b32.xlu0 %v1996, 32
    %v2001 = vpop.permute.xlu0 %2000
    %2002 = vrot.lane.b32.xlu0 %v1997, 32
    %v2003 = vpop.permute.xlu0 %2002
    %v2006 = vadd.f32 %v1986, %v2001
    %v2007 = vadd.f32 %v1987, %v2003
    %v2008 = vtanh.pop %v2006
    %v2009 = vtanh.pop %v2007
    %2012 = vrot.lane.b32.xlu0 %v2008, 64
    %v2013 = vpop.permute.xlu0 %2012
    %2014 = vrot.lane.b32.xlu0 %v2009, 64
    %v2015 = vpop.permute.xlu0 %2014
    %v2018 = vmul.f32 %v1984, %v2013
    %v2019 = vmul.f32 %v1985, %v2015
    %v2020 = vpack.c.bf16 %v2019, %v2018
    %2022 = vrot.lane.b32.xlu0 %v2020, 32
    %v2023 = vpop.permute.xlu0 %2022
    %v2025 = vsel %vm379, %v2023, 0
    %2027 = vmatpush.bf16.msra.mxu0 0
    %2028 = vmatpush.bf16.msra.mxu0 0
    %2029 = vmatpush.bf16.msra.mxu0 0
    %2030 = vmatpush.bf16.msra.mxu0 0
    %2031 = vmatpush.bf16.msra.mxu0 0
    %2032 = vmatpush.bf16.msra.mxu0 0
    %2033 = vmatpush.bf16.msra.mxu0 %v516
    %2034 = vmatpush.bf16.msra.mxu0 %v515
    %2035 = vmatmul.bf16.gmra.mxu0 %v2025
    %v2036 = vpop.f32.mrf.mxu0
    %v2037 = vadd.f32 %v1921, %v2036
    %v2038 = vpop.f32.mrf.mxu0
    %v2039 = vadd.f32 %v1923, %v2038
    %2040 = vdwg.mxu0
    %v2041 = vadd.f32 %v2037, %v358
    %v2042 = vadd.f32 %v2039, %v358
    %v2043 = vxor.u32 %v2041, 2147483648
    %v2044 = vxor.u32 %v2042, 2147483648
    %v2045 = vmul.f32 %v2043, 1.442695
    %v2046 = vpow.pop %v2045
    %v2047 = vmul.f32 %v2044, 1.442695
    %v2048 = vpow.pop %v2047
    %v2049 = vadd.f32 %v2046, 1.0
    %v2050 = vadd.f32 %v2048, 1.0
    %v2051 = vrcp.pop %v2049
    %v2052 = vmul.f32 %v2049, %v2051
    %v2053 = vsub.f32 1.0, %v2052
    %v2054 = vmul.f32 %v2051, %v2053
    %v2055 = vadd.f32 %v2051, %v2054
    %vm2056 = vweird.f32 %v2049
    %vm2057 = vweird.f32 %v2051
    %vm2058 = vmor %vm2056, %vm2057
    %v2059 = vsel %vm2058, %v2051, %v2055
    %v2060 = vand.u32 2147483647, %v2049
    %vm2061 = vcmp.eq.f32.partialorder %v2060, 8.507059e+37
    %v2062 = vand.u32 %v2049, 2147483648
    %v2063 = vor.u32 1.1754944e-38, %v2062
    %v2064 = vsel %vm2061, %v2063, %v2059
    %v2065 = vmul.f32 1.0, %v2064
    %v2066 = vrcp.pop %v2050
    %v2067 = vmul.f32 %v2050, %v2066
    %v2068 = vsub.f32 1.0, %v2067
    %v2069 = vmul.f32 %v2066, %v2068
    %v2070 = vadd.f32 %v2066, %v2069
    %vm2071 = vweird.f32 %v2050
    %vm2072 = vweird.f32 %v2066
    %vm2073 = vmor %vm2071, %vm2072
    %v2074 = vsel %vm2073, %v2066, %v2070
    %v2075 = vand.u32 2147483647, %v2050
    %vm2076 = vcmp.eq.f32.partialorder %v2075, 8.507059e+37
    %v2077 = vand.u32 %v2050, 2147483648
    %v2078 = vor.u32 1.1754944e-38, %v2077
    %v2079 = vsel %vm2076, %v2078, %v2074
    %v2080 = vmul.f32 1.0, %v2079
    %v2081 = vmul.f32 %v2065, %v365
    %v2082 = vmul.f32 %v2080, %v365
    %v2083 = vadd.f32 %v2081, %v366
    %v2084 = vadd.f32 %v2082, %v366
    %v2085 = vmul.f32 %v2083, %v1890
    %v2086 = vmul.f32 %v2084, %v1891
    %2089 = vrot.lane.b32.xlu0 %v2083, 64
    %v2090 = vpop.permute.xlu0 %2089
    %2091 = vrot.lane.b32.xlu0 %v2084, 64
    %v2092 = vpop.permute.xlu0 %2091
    %v2095 = vmul.f32 %v2083, %v2090
    %v2096 = vmul.f32 %v2084, %v2092
    %2099 = vrot.lane.b32.xlu0 %v2095, 32
    %v2100 = vpop.permute.xlu0 %2099
    %2101 = vrot.lane.b32.xlu0 %v2096, 32
    %v2102 = vpop.permute.xlu0 %2101
    %v2105 = vadd.f32 %v2085, %v2100
    %v2106 = vadd.f32 %v2086, %v2102
    %v2107 = vtanh.pop %v2105
    %v2108 = vtanh.pop %v2106
    %2111 = vrot.lane.b32.xlu0 %v2107, 64
    %v2112 = vpop.permute.xlu0 %2111
    %2113 = vrot.lane.b32.xlu0 %v2108, 64
    %v2114 = vpop.permute.xlu0 %2113
    %v2117 = vmul.f32 %v2083, %v2112
    %v2118 = vmul.f32 %v2084, %v2114
    %v2119 = vpack.c.bf16 %v2118, %v2117
    %v2120 = vld [vmem:[#allocation12] sm:$0xf]
    %v2121 = vld [vmem:[#allocation12 + $0x4] sm:$0xf]
    %v2122 = vld [vmem:[#allocation12 + $0x8] sm:$0xf]
    %v2123 = vld [vmem:[#allocation12 + $0xc] sm:$0xf]
    %v2124 = vld [vmem:[#allocation14] sm:$0x1]
    %v2126 = vperm.slane %v2124, 0
    %2129 = vrot.lane.b32.xlu0 %v2119, 32
    %v2130 = vpop.permute.xlu0 %2129
    %v2135 = vunpack.c.l.b16 %v2120
    %v2136 = vunpack.c.l.b16 %v2121
    %v2137 = vunpack.c.l.b16 %v2122
    %v2138 = vunpack.c.l.b16 %v2123
    %v2139 = vpack.c.b16 %v2136, %v2135
    %v2140 = vpack.c.b16 %v2138, %v2137
    %v2144 = vsel %vm379, %v2130, 0
    %2146 = vmatpush.bf16.msra.mxu0 0
    %2147 = vmatpush.bf16.msra.mxu0 0
    %2148 = vmatpush.bf16.msra.mxu0 0
    %2149 = vmatpush.bf16.msra.mxu0 0
    %2150 = vmatpush.bf16.msra.mxu0 0
    %2151 = vmatpush.bf16.msra.mxu0 0
    %2152 = vmatpush.bf16.msra.mxu0 %v2140
    %2153 = vmatpush.bf16.msra.mxu0 %v2139
    %2154 = vmatmul.bf16.gmra.mxu0 %v2144
    %v2155 = vpop.f32.mrf.mxu0
    %v2156 = vadd.f32 %v2126, %v2155
    %v2157 = vpop.f32.mrf.mxu0
    %v2158 = vadd.f32 %v2126, %v2157
    %2159 = vdwg.mxu0
    %v2160 = vmax.f32 %v2156, 0.0
    %v2161 = vmax.f32 %v2158, 0.0
    %v2162 = vand.u32 2147483647, %v2156
    %v2163 = vand.u32 2147483647, %v2158
    %v2164 = vsub.f32 0.0, %v2162
    %v2165 = vsub.f32 0.0, %v2163
    %v2166 = vmul.f32 %v2164, 1.442695
    %v2167 = vpow.pop %v2166
    %v2168 = vmul.f32 %v2165, 1.442695
    %v2169 = vpow.pop %v2168
    %v2170 = vadd.f32 %v2167, 1.0
    %v2171 = vadd.f32 %v2169, 1.0
    %v2172 = vlog2.pop %v2170
    %v2173 = vmul.f32 %v2172, 0.6931472
    %v2174 = vlog2.pop %v2171
    %v2175 = vmul.f32 %v2174, 0.6931472
    %v2176 = vadd.f32 %v2160, %v2173
    %v2177 = vadd.f32 %v2161, %v2175
    %v2178 = vtanh.pop %v2176
    %v2179 = vtanh.pop %v2177
    %v2180 = vmul.f32 %v2156, %v2178
    %v2181 = vmul.f32 %v2158, %v2179
    %v2182 = vpack.c.bf16 %v2181, %v2180
    %v2183 = vld [vmem:[%s9] sm:$0xf]
    %v2184 = vld [vmem:[%s9 + $0x4] sm:$0xf]
    %v2185 = vld [vmem:[%s9 + $0x8] sm:$0xf]
    %v2186 = vld [vmem:[%s9 + $0xc] sm:$0xf]
    %v2187 = vld [vmem:[%s9 + $0x10] sm:$0xf]
    %v2188 = vld [vmem:[%s9 + $0x14] sm:$0xf]
    %v2189 = vld [vmem:[%s9 + $0x18] sm:$0xf]
    %v2190 = vld [vmem:[%s9 + $0x1c] sm:$0xf]
    %v2191 = vld [vmem:[%s9 + $0x20] sm:$0xf]
    %v2192 = vld [vmem:[%s9 + $0x24] sm:$0xf]
    %v2193 = vld [vmem:[%s9 + $0x28] sm:$0xf]
    %v2194 = vld [vmem:[%s9 + $0x2c] sm:$0xf]
    %v2195 = vld [vmem:[%s9 + $0x30] sm:$0xf]
    %v2196 = vld [vmem:[%s9 + $0x34] sm:$0xf]
    %v2197 = vld [vmem:[%s9 + $0x38] sm:$0xf]
    %v2198 = vld [vmem:[%s9 + $0x3c] sm:$0xf]
    %v2199 = vld [vmem:[%s10] sm:$0x1]
    %v2201 = vperm.slane %v2199, 0
    %v2219 = vunpack.c.l.b16 %v2183
    %v2220 = vunpack.c.l.b16 %v2184
    %v2221 = vunpack.c.l.b16 %v2185
    %v2222 = vunpack.c.l.b16 %v2186
    %v2223 = vunpack.c.l.b16 %v2187
    %v2224 = vunpack.c.l.b16 %v2188
    %v2225 = vunpack.c.l.b16 %v2189
    %v2226 = vunpack.c.l.b16 %v2190
    %v2227 = vunpack.c.l.b16 %v2191
    %v2228 = vunpack.c.l.b16 %v2192
    %v2229 = vunpack.c.l.b16 %v2193
    %v2230 = vunpack.c.l.b16 %v2194
    %v2231 = vunpack.c.l.b16 %v2195
    %v2232 = vunpack.c.l.b16 %v2196
    %v2233 = vunpack.c.l.b16 %v2197
    %v2234 = vunpack.c.l.b16 %v2198
    %v2235 = vpack.c.b16 %v2220, %v2219
    %v2236 = vpack.c.b16 %v2222, %v2221
    %v2237 = vpack.c.b16 %v2224, %v2223
    %v2238 = vpack.c.b16 %v2226, %v2225
    %v2239 = vpack.c.b16 %v2228, %v2227
    %v2240 = vpack.c.b16 %v2230, %v2229
    %v2241 = vpack.c.b16 %v2232, %v2231
    %v2242 = vpack.c.b16 %v2234, %v2233
    %2251 = vmatpush.bf16.msra.mxu0 %v2242
    %2252 = vmatpush.bf16.msra.mxu0 %v2241
    %2253 = vmatpush.bf16.msra.mxu0 %v2240
    %2254 = vmatpush.bf16.msra.mxu0 %v2239
    %2255 = vmatpush.bf16.msra.mxu0 %v2238
    %2256 = vmatpush.bf16.msra.mxu0 %v2237
    %2257 = vmatpush.bf16.msra.mxu0 %v2236
    %2258 = vmatpush.bf16.msra.mxu0 %v2235
    %2259 = vmatmul.bf16.gmra.mxu0 %v2182
    %v2260 = vpop.f32.mrf.mxu0
    %v2261 = vadd.f32 %v2201, %v2260
    %v2262 = vpop.f32.mrf.mxu0
    %v2263 = vadd.f32 %v2201, %v2262
    %2264 = vdwg.mxu0
    %v2265 = vmax.f32 %v2261, 0.0
    %v2266 = vmax.f32 %v2263, 0.0
    %v2267 = vand.u32 2147483647, %v2261
    %v2268 = vand.u32 2147483647, %v2263
    %v2269 = vsub.f32 0.0, %v2267
    %v2270 = vsub.f32 0.0, %v2268
    %v2271 = vmul.f32 %v2269, 1.442695
    %v2272 = vpow.pop %v2271
    %v2273 = vmul.f32 %v2270, 1.442695
    %v2274 = vpow.pop %v2273
    %v2275 = vadd.f32 %v2272, 1.0
    %v2276 = vadd.f32 %v2274, 1.0
    %v2277 = vlog2.pop %v2275
    %v2278 = vmul.f32 %v2277, 0.6931472
    %v2279 = vlog2.pop %v2276
    %v2280 = vmul.f32 %v2279, 0.6931472
    %v2281 = vadd.f32 %v2265, %v2278
    %v2282 = vadd.f32 %v2266, %v2280
    %v2283 = vtanh.pop %v2281
    %v2284 = vtanh.pop %v2282
    %v2285 = vmul.f32 %v2261, %v2283
    %v2286 = vmul.f32 %v2263, %v2284
    %v2287 = vpack.c.bf16 %v2286, %v2285
    %v2288 = vld [vmem:[#allocation15] sm:$0xf]
    %v2289 = vld [vmem:[#allocation15 + $0x4] sm:$0xf]
    %v2290 = vld [vmem:[#allocation15 + $0x8] sm:$0xf]
    %v2291 = vld [vmem:[#allocation15 + $0xc] sm:$0xf]
    %v2292 = vld [vmem:[#allocation15 + $0x10] sm:$0xf]
    %v2293 = vld [vmem:[#allocation15 + $0x14] sm:$0xf]
    %v2294 = vld [vmem:[#allocation15 + $0x18] sm:$0xf]
    %v2295 = vld [vmem:[#allocation15 + $0x1c] sm:$0xf]
    %v2296 = vld [vmem:[#allocation15 + $0x20] sm:$0xf]
    %v2297 = vld [vmem:[#allocation15 + $0x24] sm:$0xf]
    %v2298 = vld [vmem:[#allocation15 + $0x28] sm:$0xf]
    %v2299 = vld [vmem:[#allocation15 + $0x2c] sm:$0xf]
    %v2300 = vld [vmem:[#allocation15 + $0x30] sm:$0xf]
    %v2301 = vld [vmem:[#allocation15 + $0x34] sm:$0xf]
    %v2302 = vld [vmem:[#allocation15 + $0x38] sm:$0xf]
    %v2303 = vld [vmem:[#allocation15 + $0x3c] sm:$0xf]
    %v2304 = vld [vmem:[%s12] sm:$0x1]
    %v2306 = vperm.slane %v2304, 0
    %v2324 = vunpack.c.l.b16 %v2288
    %v2325 = vunpack.c.l.b16 %v2289
    %v2326 = vunpack.c.l.b16 %v2290
    %v2327 = vunpack.c.l.b16 %v2291
    %v2328 = vunpack.c.l.b16 %v2292
    %v2329 = vunpack.c.l.b16 %v2293
    %v2330 = vunpack.c.l.b16 %v2294
    %v2331 = vunpack.c.l.b16 %v2295
    %v2332 = vunpack.c.l.b16 %v2296
    %v2333 = vunpack.c.l.b16 %v2297
    %v2334 = vunpack.c.l.b16 %v2298
    %v2335 = vunpack.c.l.b16 %v2299
    %v2336 = vunpack.c.l.b16 %v2300
    %v2337 = vunpack.c.l.b16 %v2301
    %v2338 = vunpack.c.l.b16 %v2302
    %v2339 = vunpack.c.l.b16 %v2303
    %v2340 = vpack.c.b16 %v2325, %v2324
    %v2341 = vpack.c.b16 %v2327, %v2326
    %v2342 = vpack.c.b16 %v2329, %v2328
    %v2343 = vpack.c.b16 %v2331, %v2330
    %v2344 = vpack.c.b16 %v2333, %v2332
    %v2345 = vpack.c.b16 %v2335, %v2334
    %v2346 = vpack.c.b16 %v2337, %v2336
    %v2347 = vpack.c.b16 %v2339, %v2338
    %2356 = vmatpush.bf16.msra.mxu0 %v2347
    %2357 = vmatpush.bf16.msra.mxu0 %v2346
    %2358 = vmatpush.bf16.msra.mxu0 %v2345
    %2359 = vmatpush.bf16.msra.mxu0 %v2344
    %2360 = vmatpush.bf16.msra.mxu0 %v2343
    %2361 = vmatpush.bf16.msra.mxu0 %v2342
    %2362 = vmatpush.bf16.msra.mxu0 %v2341
    %2363 = vmatpush.bf16.msra.mxu0 %v2340
    %2364 = vmatmul.bf16.gmra.mxu0 %v2287
    %v2365 = vpop.f32.mrf.mxu0
    %v2366 = vadd.f32 %v2306, %v2365
    %v2367 = vpop.f32.mrf.mxu0
    %v2368 = vadd.f32 %v2306, %v2367
    %2369 = vdwg.mxu0
    %v2370 = vmax.f32 %v2366, 0.0
    %v2371 = vmax.f32 %v2368, 0.0
    %v2372 = vand.u32 2147483647, %v2366
    %v2373 = vand.u32 2147483647, %v2368
    %v2374 = vsub.f32 0.0, %v2372
    %v2375 = vsub.f32 0.0, %v2373
    %v2376 = vmul.f32 %v2374, 1.442695
    %v2377 = vpow.pop %v2376
    %v2378 = vmul.f32 %v2375, 1.442695
    %v2379 = vpow.pop %v2378
    %v2380 = vadd.f32 %v2377, 1.0
    %v2381 = vadd.f32 %v2379, 1.0
    %v2382 = vlog2.pop %v2380
    %v2383 = vmul.f32 %v2382, 0.6931472
    %v2384 = vlog2.pop %v2381
    %v2385 = vmul.f32 %v2384, 0.6931472
    %v2386 = vadd.f32 %v2370, %v2383
    %v2387 = vadd.f32 %v2371, %v2385
    %v2388 = vtanh.pop %v2386
    %v2389 = vtanh.pop %v2387
    %v2390 = vmul.f32 %v2366, %v2388
    %v2391 = vmul.f32 %v2368, %v2389
    %v2392 = vpack.c.bf16 %v2391, %v2390
    %v2393 = vld [vmem:[#allocation17] sm:$0xf]
    %v2394 = vld [vmem:[#allocation17 + $0x4] sm:$0xf]
    %v2395 = vld [vmem:[#allocation17 + $0x8] sm:$0xf]
    %v2396 = vld [vmem:[#allocation17 + $0xc] sm:$0xf]
    %v2397 = vld [vmem:[#allocation17 + $0x10] sm:$0xf]
    %v2398 = vld [vmem:[#allocation17 + $0x14] sm:$0xf]
    %v2399 = vld [vmem:[#allocation17 + $0x18] sm:$0xf]
    %v2400 = vld [vmem:[#allocation17 + $0x1c] sm:$0xf]
    %v2401 = vld [vmem:[#allocation17 + $0x20] sm:$0xf]
    %v2402 = vld [vmem:[#allocation17 + $0x24] sm:$0xf]
    %v2403 = vld [vmem:[#allocation17 + $0x28] sm:$0xf]
    %v2404 = vld [vmem:[#allocation17 + $0x2c] sm:$0xf]
    %v2405 = vld [vmem:[#allocation17 + $0x30] sm:$0xf]
    %v2406 = vld [vmem:[#allocation17 + $0x34] sm:$0xf]
    %v2407 = vld [vmem:[#allocation17 + $0x38] sm:$0xf]
    %v2408 = vld [vmem:[#allocation17 + $0x3c] sm:$0xf]
    %v2409 = vld [vmem:[%s14] sm:$0x1]
    %v2411 = vperm.slane %v2409, 0
    %v2429 = vunpack.c.l.b16 %v2393
    %v2430 = vunpack.c.l.b16 %v2394
    %v2431 = vunpack.c.l.b16 %v2395
    %v2432 = vunpack.c.l.b16 %v2396
    %v2433 = vunpack.c.l.b16 %v2397
    %v2434 = vunpack.c.l.b16 %v2398
    %v2435 = vunpack.c.l.b16 %v2399
    %v2436 = vunpack.c.l.b16 %v2400
    %v2437 = vunpack.c.l.b16 %v2401
    %v2438 = vunpack.c.l.b16 %v2402
    %v2439 = vunpack.c.l.b16 %v2403
    %v2440 = vunpack.c.l.b16 %v2404
    %v2441 = vunpack.c.l.b16 %v2405
    %v2442 = vunpack.c.l.b16 %v2406
    %v2443 = vunpack.c.l.b16 %v2407
    %v2444 = vunpack.c.l.b16 %v2408
    %v2445 = vpack.c.b16 %v2430, %v2429
    %v2446 = vpack.c.b16 %v2432, %v2431
    %v2447 = vpack.c.b16 %v2434, %v2433
    %v2448 = vpack.c.b16 %v2436, %v2435
    %v2449 = vpack.c.b16 %v2438, %v2437
    %v2450 = vpack.c.b16 %v2440, %v2439
    %v2451 = vpack.c.b16 %v2442, %v2441
    %v2452 = vpack.c.b16 %v2444, %v2443
    %2461 = vmatpush.bf16.msra.mxu0 %v2452
    %2462 = vmatpush.bf16.msra.mxu0 %v2451
    %2463 = vmatpush.bf16.msra.mxu0 %v2450
    %2464 = vmatpush.bf16.msra.mxu0 %v2449
    %2465 = vmatpush.bf16.msra.mxu0 %v2448
    %2466 = vmatpush.bf16.msra.mxu0 %v2447
    %2467 = vmatpush.bf16.msra.mxu0 %v2446
    %2468 = vmatpush.bf16.msra.mxu0 %v2445
    %2469 = vmatmul.bf16.gmra.mxu0 %v2392
    %v2470 = vpop.f32.mrf.mxu0
    %v2471 = vadd.f32 %v2411, %v2470
    %v2472 = vpop.f32.mrf.mxu0
    %v2473 = vadd.f32 %v2411, %v2472
    %2474 = vdwg.mxu0
    %2475 = vst [vmem:[#allocation18] sm:$0xff] %v2471
    %2476 = vst [vmem:[#allocation18 + $0x8] sm:$0xff] %v2473
    // Predicated region
    $region98: #{tpu_custom_call.1} parent=1 // pred_check
      _
    $region99: #{tpu_custom_call.1} parent=1 // pred_check_branch
      %2478 = sbr.rel (0) target = $region101
    $region100: #{tpu_custom_call.1} parent=1 // pred_region
      %2480 = vsyncadd [#allocation5], 0
      %s2481 = sshll.u32 [#allocation18], 4
      %s2482 = int_to_ptr.vmem [resolvable:$true] %s2481
      %s2483 = sshll.u32 %s15, 4
      %s2484 = int_to_ptr.hbm [resolvable:$true] %s2483
      %2489 = dma.vmem_to_hbm [thread:$0]  %s2482, 256, %s2484, [#allocation5], 128, 128, 8
    $region101: #{tpu_custom_call.1} parent=1 // pred_fallthru
      _
    // Predicated region
    $region102: #{tpu_custom_call.1} parent=1 // pred_check
      _
    $region103: #{tpu_custom_call.1} parent=1 // pred_check_branch
      %2491 = sbr.rel (0) target = $region105
    $region104: #{tpu_custom_call.1} parent=1 // pred_region
      %2493 = dma.done [#allocation5], 256
    $region105: #{tpu_custom_call.1} parent=1 // pred_fallthru
      _
    %2494 = vsyncpa [#allocation4], 1
    %2495 = vsyncpa [#allocation7], 1
    %2496 = vsyncpa [#allocation10], 1
    %2497 = vsyncpa [#allocation13], 1
    %2498 = vsyncpa [#allocation16], 1
    %2499 = vsyncpa [#allocation5], 1

</llo_original>
